<compile_context>
chip_gen: v5e
topology: v5e:2x2
jax: 0.10.0
libtpu: 0.0.40
codegen_flags: <defaults>
</compile_context>

<pallas_src>
import functools

import jax
import jax.numpy as jnp
from jax.experimental import pallas as pl
from jax.experimental.pallas import tpu as pltpu

BN_EPS = 1e-5          # torch.nn.BatchNorm1d default eps
NORM_EPS = 1e-12       # torch.nn.functional.normalize default eps


def _round_up(x, m):
    return (x + m - 1) // m * m


def _mlp_kernel(x_ref,
                gamma_ref, beta_ref, mean_ref, var_ref,
                w1_ref, b1_ref, w2_ref, b2_ref, w3_ref, b3_ref,
                o_ref, *, mm_dtype):
    """Whole fused forward for one row tile; everything lives in VMEM/vregs."""
    x = x_ref[...]

    # BatchNorm1d (inference / running stats), folded into scale & shift.
    scale = gamma_ref[...] * jax.lax.rsqrt(var_ref[...] + BN_EPS)
    shift = beta_ref[...] - mean_ref[...] * scale
    h = x * scale + shift

    def dense(a, w_ref, b_ref):
        # mm_dtype (bf16 on v6e/v7x, f32 otherwise) operands on the MXU,
        # f32 accumulate, f32 bias add.
        return jnp.dot(a.astype(mm_dtype), w_ref[...],
                       preferred_element_type=jnp.float32) + b_ref[...]

    h = jnp.maximum(dense(h, w1_ref, b1_ref), 0.0)   # linear1 + ReLU
    h = jnp.maximum(dense(h, w2_ref, b2_ref), 0.0)   # linear2 + ReLU
    h = dense(h, w3_ref, b3_ref)                     # linear3 (padded to 128 lanes)

    # F.normalize(dim=1): x / max(||x||_2, eps).  Padded output columns are
    # exactly zero (zero weight columns, zero bias), so they do not perturb
    # the norm and stay zero after the divide.
    sq = jnp.sum(h * h, axis=-1, keepdims=True)
    norm = jnp.maximum(jnp.sqrt(sq), NORM_EPS)
    o_ref[...] = (h / norm).astype(o_ref.dtype)


def mlp_forward(x, params, *, tile_n=1024, matmul_dtype=jnp.float32):
    """x: (N, num_i) float32.  Returns (N, num_o) float32 (L2-normalized rows)."""
    N, num_i = x.shape
    num_h = params["w1"].shape[1]
    num_o = params["w3"].shape[1]
    assert params["w1"].shape == (num_i, num_h)

    # --- lane-dense output: pad the last layer to a multiple of 128 columns ---
    out_pad = _round_up(max(num_o, 1), 128)
    w3 = jnp.pad(params["w3"], ((0, 0), (0, out_pad - num_o)))
    b3 = jnp.pad(params["b3"], ((0, 0), (0, out_pad - num_o)))

    w1, b1 = params["w1"], params["b1"]
    w2, b2 = params["w2"], params["b2"]
    gamma, beta = params["bn_gamma"], params["bn_beta"]
    mean, var = params["bn_mean"], params["bn_var"]

    # matmul operands in matmul_dtype; biases / BN params / epilogue stay f32.
    w1 = w1.astype(matmul_dtype)
    w2 = w2.astype(matmul_dtype)
    w3 = w3.astype(matmul_dtype)

    # --- ragged N: clamp the row tile and zero-pad the batch to a multiple ---
    tile_n = _round_up(max(8, min(int(tile_n), _round_up(N, 8))), 8)
    n_pad = _round_up(N, tile_n)
    if n_pad != N:
        x = jnp.pad(x, ((0, n_pad - N), (0, 0)))

    def full(arr):
        # Whole array resident in VMEM for every grid step (no per-step DMA).
        nd = arr.ndim
        return pl.BlockSpec(arr.shape, lambda i: (0,) * nd)

    kernel = functools.partial(_mlp_kernel, mm_dtype=matmul_dtype)

    out = pl.pallas_call(
        kernel,
        out_shape=jax.ShapeDtypeStruct((n_pad, out_pad), jnp.float32),
        grid_spec=pltpu.PrefetchScalarGridSpec(
            num_scalar_prefetch=0,
            grid=(n_pad // tile_n,),
            in_specs=[
                pl.BlockSpec((tile_n, num_i), lambda i: (i, 0)),   # x row tile
                full(gamma), full(beta), full(mean), full(var),    # BatchNorm1d
                full(w1), full(b1),                                # linear1
                full(w2), full(b2),                                # linear2
                full(w3), full(b3),                                # linear3 (padded)
            ],
            out_specs=pl.BlockSpec((tile_n, out_pad), lambda i: (i, 0)),
        ),
        compiler_params=pltpu.CompilerParams(
            dimension_semantics=("parallel",)),   # rows shard across TCs on v7x
    )(x, gamma, beta, mean, var, w1, b1, w2, b2, w3, b3)

    return out[:N, :num_o]


def init_params(key, num_i, num_h, num_o):
    """Deterministic init matching the PyTorch module's parameter shapes
    (linear weights stored transposed: (in_dim, out_dim))."""
    params = {}
    key, kg, kb, km, kv = jax.random.split(key, 5)
    params["bn_gamma"] = jax.random.uniform(kg, (1, num_i), jnp.float32, 0.5, 1.5)
    params["bn_beta"] = jax.random.uniform(kb, (1, num_i), jnp.float32, -0.5, 0.5)
    params["bn_mean"] = 0.1 * jax.random.normal(km, (1, num_i), jnp.float32)
    params["bn_var"] = jax.random.uniform(kv, (1, num_i), jnp.float32, 0.5, 1.5)

    dims = [(num_i, num_h), (num_h, num_h), (num_h, num_o)]
    for idx, (din, dout) in enumerate(dims, start=1):
        key, kw, kbi = jax.random.split(key, 3)
        bound = 1.0 / (din ** 0.5)   # PyTorch default nn.Linear init scale
        params[f"w{idx}"] = jax.random.uniform(
            kw, (din, dout), jnp.float32, -bound, bound)
        params[f"b{idx}"] = jax.random.uniform(
            kbi, (1, dout), jnp.float32, -bound, bound)
    return params


def mlp_reference(x, params):
    """Pure-JAX reference for correctness checking (eval-mode BatchNorm)."""
    scale = params["bn_gamma"] * jax.lax.rsqrt(params["bn_var"] + BN_EPS)
    shift = params["bn_beta"] - params["bn_mean"] * scale
    h = x * scale + shift
    h = jnp.maximum(h @ params["w1"] + params["b1"], 0.0)
    h = jnp.maximum(h @ params["w2"] + params["b2"], 0.0)
    h = h @ params["w3"] + params["b3"]
    norm = jnp.maximum(jnp.sqrt(jnp.sum(h * h, axis=1, keepdims=True)), NORM_EPS)
    return h / norm


if __name__ == "__main__":
    key = jax.random.PRNGKey(0)
    num_i, num_h, num_o = 256, 128, 32   # BatchNorm1d(256) fixes num_i = 256
    N = 200                              # deliberately ragged batch size

    key, kx = jax.random.split(key)
    x = jax.random.normal(kx, (N, num_i), dtype=jnp.float32)
    params = init_params(key, num_i, num_h, num_o)

    ref = mlp_reference(x, params)

    # f32-operand path.
    out = jax.block_until_ready(mlp_forward(x, params))
    assert out.shape == (N, num_o)
    assert jnp.allclose(out, ref, atol=2e-4, rtol=2e-4), "f32 mismatch vs reference"

    # bf16-operand path (MXU-native on v6e/v7x); f32 accumulate, looser tolerance.
    out_bf16 = jax.block_until_ready(
        mlp_forward(x, params, matmul_dtype=jnp.bfloat16))
    assert out_bf16.shape == (N, num_o)
    assert jnp.allclose(out_bf16, ref, atol=5e-2, rtol=5e-2), "bf16 mismatch vs reference"

    print("KERNEL_OK")
</pallas_src>

<mosaic_0001>
module attributes {stable_mosaic.version = 11 : i64} {
  func.func @_mlp_kernel(%arg0: i32, %arg1: memref<200x256xf32, #tpu.memory_space<vmem>>, %arg2: memref<1x256xf32, #tpu.memory_space<vmem>>, %arg3: memref<1x256xf32, #tpu.memory_space<vmem>>, %arg4: memref<1x256xf32, #tpu.memory_space<vmem>>, %arg5: memref<1x256xf32, #tpu.memory_space<vmem>>, %arg6: memref<256x128xf32, #tpu.memory_space<vmem>>, %arg7: memref<1x128xf32, #tpu.memory_space<vmem>>, %arg8: memref<128x128xf32, #tpu.memory_space<vmem>>, %arg9: memref<1x128xf32, #tpu.memory_space<vmem>>, %arg10: memref<128x128xf32, #tpu.memory_space<vmem>>, %arg11: memref<1x128xf32, #tpu.memory_space<vmem>>, %arg12: memref<200x128xf32, #tpu.memory_space<vmem>>) attributes {dimension_semantics = [#tpu.dimension_semantics<parallel>], iteration_bounds = array<i64: 1>, scalar_prefetch = 0 : i64, scratch_operands = 0 : i64, tpu.core_type = #tpu.core_type<tc>, window_params = [{transform_indices = @transform_0, window_bounds = array<i64: 200, 256>}, {pipeline_mode = #tpu.pipeline_mode<synchronous>, transform_indices = @transform_1, window_bounds = array<i64: 1, 256>}, {pipeline_mode = #tpu.pipeline_mode<synchronous>, transform_indices = @transform_2, window_bounds = array<i64: 1, 256>}, {pipeline_mode = #tpu.pipeline_mode<synchronous>, transform_indices = @transform_3, window_bounds = array<i64: 1, 256>}, {pipeline_mode = #tpu.pipeline_mode<synchronous>, transform_indices = @transform_4, window_bounds = array<i64: 1, 256>}, {pipeline_mode = #tpu.pipeline_mode<synchronous>, transform_indices = @transform_5, window_bounds = array<i64: 256, 128>}, {pipeline_mode = #tpu.pipeline_mode<synchronous>, transform_indices = @transform_6, window_bounds = array<i64: 1, 128>}, {pipeline_mode = #tpu.pipeline_mode<synchronous>, transform_indices = @transform_7, window_bounds = array<i64: 128, 128>}, {pipeline_mode = #tpu.pipeline_mode<synchronous>, transform_indices = @transform_8, window_bounds = array<i64: 1, 128>}, {pipeline_mode = #tpu.pipeline_mode<synchronous>, transform_indices = @transform_9, window_bounds = array<i64: 128, 128>}, {pipeline_mode = #tpu.pipeline_mode<synchronous>, transform_indices = @transform_10, window_bounds = array<i64: 1, 128>}, {transform_indices = @transform_11, window_bounds = array<i64: 200, 128>}]} {
    %c0 = arith.constant 0 : index
    %c0_0 = arith.constant 0 : index
    %0 = vector.load %arg1[%c0, %c0_0] : memref<200x256xf32, #tpu.memory_space<vmem>>, vector<200x256xf32>
    %c0_1 = arith.constant 0 : index
    %c0_2 = arith.constant 0 : index
    %1 = vector.load %arg2[%c0_1, %c0_2] : memref<1x256xf32, #tpu.memory_space<vmem>>, vector<1x256xf32>
    %c0_3 = arith.constant 0 : index
    %c0_4 = arith.constant 0 : index
    %2 = vector.load %arg5[%c0_3, %c0_4] : memref<1x256xf32, #tpu.memory_space<vmem>>, vector<1x256xf32>
    %cst = arith.constant 9.99999974E-6 : f32
    %3 = vector.broadcast %cst : f32 to vector<1x256xf32>
    %4 = arith.addf %2, %3 : vector<1x256xf32>
    %5 = math.rsqrt %4 : vector<1x256xf32>
    %6 = arith.mulf %1, %5 : vector<1x256xf32>
    %c0_5 = arith.constant 0 : index
    %c0_6 = arith.constant 0 : index
    %7 = vector.load %arg3[%c0_5, %c0_6] : memref<1x256xf32, #tpu.memory_space<vmem>>, vector<1x256xf32>
    %c0_7 = arith.constant 0 : index
    %c0_8 = arith.constant 0 : index
    %8 = vector.load %arg4[%c0_7, %c0_8] : memref<1x256xf32, #tpu.memory_space<vmem>>, vector<1x256xf32>
    %9 = arith.mulf %8, %6 : vector<1x256xf32>
    %10 = arith.subf %7, %9 : vector<1x256xf32>
    %11 = vector.broadcast %6 : vector<1x256xf32> to vector<200x256xf32>
    %12 = arith.mulf %0, %11 : vector<200x256xf32>
    %13 = vector.broadcast %10 : vector<1x256xf32> to vector<200x256xf32>
    %14 = arith.addf %12, %13 : vector<200x256xf32>
    %c0_9 = arith.constant 0 : index
    %c0_10 = arith.constant 0 : index
    %15 = vector.load %arg6[%c0_9, %c0_10] : memref<256x128xf32, #tpu.memory_space<vmem>>, vector<256x128xf32>
    %cst_11 = arith.constant dense<0.000000e+00> : vector<200x128xf32>
    %16 = tpu.matmul %14, %15, %cst_11 {dimension_numbers = #tpu.dot_dimension_numbers<[1], [0], [0], [1], [0, 0, 1, 1], [], []>} : vector<200x256xf32>, vector<256x128xf32>, vector<200x128xf32> -> vector<200x128xf32>
    %c0_12 = arith.constant 0 : index
    %c0_13 = arith.constant 0 : index
    %17 = vector.load %arg7[%c0_12, %c0_13] : memref<1x128xf32, #tpu.memory_space<vmem>>, vector<1x128xf32>
    %18 = vector.broadcast %17 : vector<1x128xf32> to vector<200x128xf32>
    %19 = arith.addf %16, %18 : vector<200x128xf32>
    %cst_14 = arith.constant 0.000000e+00 : f32
    %20 = vector.broadcast %cst_14 : f32 to vector<200x128xf32>
    %21 = arith.maximumf %19, %20 : vector<200x128xf32>
    %c0_15 = arith.constant 0 : index
    %c0_16 = arith.constant 0 : index
    %22 = vector.load %arg8[%c0_15, %c0_16] : memref<128x128xf32, #tpu.memory_space<vmem>>, vector<128x128xf32>
    %cst_17 = arith.constant dense<0.000000e+00> : vector<200x128xf32>
    %23 = tpu.matmul %21, %22, %cst_17 {dimension_numbers = #tpu.dot_dimension_numbers<[1], [0], [0], [1], [0, 0, 1, 1], [], []>} : vector<200x128xf32>, vector<128x128xf32>, vector<200x128xf32> -> vector<200x128xf32>
    %c0_18 = arith.constant 0 : index
    %c0_19 = arith.constant 0 : index
    %24 = vector.load %arg9[%c0_18, %c0_19] : memref<1x128xf32, #tpu.memory_space<vmem>>, vector<1x128xf32>
    %25 = vector.broadcast %24 : vector<1x128xf32> to vector<200x128xf32>
    %26 = arith.addf %23, %25 : vector<200x128xf32>
    %cst_20 = arith.constant 0.000000e+00 : f32
    %27 = vector.broadcast %cst_20 : f32 to vector<200x128xf32>
    %28 = arith.maximumf %26, %27 : vector<200x128xf32>
    %c0_21 = arith.constant 0 : index
    %c0_22 = arith.constant 0 : index
    %29 = vector.load %arg10[%c0_21, %c0_22] : memref<128x128xf32, #tpu.memory_space<vmem>>, vector<128x128xf32>
    %cst_23 = arith.constant dense<0.000000e+00> : vector<200x128xf32>
    %30 = tpu.matmul %28, %29, %cst_23 {dimension_numbers = #tpu.dot_dimension_numbers<[1], [0], [0], [1], [0, 0, 1, 1], [], []>} : vector<200x128xf32>, vector<128x128xf32>, vector<200x128xf32> -> vector<200x128xf32>
    %c0_24 = arith.constant 0 : index
    %c0_25 = arith.constant 0 : index
    %31 = vector.load %arg11[%c0_24, %c0_25] : memref<1x128xf32, #tpu.memory_space<vmem>>, vector<1x128xf32>
    %32 = vector.broadcast %31 : vector<1x128xf32> to vector<200x128xf32>
    %33 = arith.addf %30, %32 : vector<200x128xf32>
    %34 = arith.mulf %33, %33 : vector<200x128xf32>
    %cst_26 = arith.constant dense<0.000000e+00> : vector<200xf32>
    %35 = vector.multi_reduction <add>, %34, %cst_26 [1] : vector<200x128xf32> to vector<200xf32>
    %36 = vector.shape_cast %35 : vector<200xf32> to vector<200x1xf32>
    %37 = math.sqrt %36 : vector<200x1xf32>
    %cst_27 = arith.constant 9.99999996E-13 : f32
    %38 = vector.broadcast %cst_27 : f32 to vector<200x1xf32>
    %39 = arith.maximumf %37, %38 : vector<200x1xf32>
    %40 = vector.broadcast %39 : vector<200x1xf32> to vector<200x128xf32>
    %41 = arith.divf %33, %40 : vector<200x128xf32>
    %c0_28 = arith.constant 0 : index
    %c0_29 = arith.constant 0 : index
    %42 = vector.load %arg12[%c0_28, %c0_29] : memref<200x128xf32, #tpu.memory_space<vmem>>, vector<200x128xf32>
    tpu.vector_store %arg12[%c0_28, %c0_29], %41 {strides = array<i32>} : memref<200x128xf32, #tpu.memory_space<vmem>>, vector<200x128xf32>,
    return
  }
  func.func @transform_0(%arg0: i32) -> (i32, i32) {
    %c0_i32 = arith.constant 0 : i32
    %c0_i32_0 = arith.constant 0 : i32
    return %arg0, %c0_i32 : i32, i32
  }
  func.func @transform_1(%arg0: i32) -> (i32, i32) {
    %c0_i32 = arith.constant 0 : i32
    %c0_i32_0 = arith.constant 0 : i32
    %c0_i32_1 = arith.constant 0 : i32
    return %c0_i32, %c0_i32_0 : i32, i32
  }
  func.func @transform_2(%arg0: i32) -> (i32, i32) {
    %c0_i32 = arith.constant 0 : i32
    %c0_i32_0 = arith.constant 0 : i32
    %c0_i32_1 = arith.constant 0 : i32
    return %c0_i32, %c0_i32_0 : i32, i32
  }
  func.func @transform_3(%arg0: i32) -> (i32, i32) {
    %c0_i32 = arith.constant 0 : i32
    %c0_i32_0 = arith.constant 0 : i32
    %c0_i32_1 = arith.constant 0 : i32
    return %c0_i32, %c0_i32_0 : i32, i32
  }
  func.func @transform_4(%arg0: i32) -> (i32, i32) {
    %c0_i32 = arith.constant 0 : i32
    %c0_i32_0 = arith.constant 0 : i32
    %c0_i32_1 = arith.constant 0 : i32
    return %c0_i32, %c0_i32_0 : i32, i32
  }
  func.func @transform_5(%arg0: i32) -> (i32, i32) {
    %c0_i32 = arith.constant 0 : i32
    %c0_i32_0 = arith.constant 0 : i32
    %c0_i32_1 = arith.constant 0 : i32
    return %c0_i32, %c0_i32_0 : i32, i32
  }
  func.func @transform_6(%arg0: i32) -> (i32, i32) {
    %c0_i32 = arith.constant 0 : i32
    %c0_i32_0 = arith.constant 0 : i32
    %c0_i32_1 = arith.constant 0 : i32
    return %c0_i32, %c0_i32_0 : i32, i32
  }
  func.func @transform_7(%arg0: i32) -> (i32, i32) {
    %c0_i32 = arith.constant 0 : i32
    %c0_i32_0 = arith.constant 0 : i32
    %c0_i32_1 = arith.constant 0 : i32
    return %c0_i32, %c0_i32_0 : i32, i32
  }
  func.func @transform_8(%arg0: i32) -> (i32, i32) {
    %c0_i32 = arith.constant 0 : i32
    %c0_i32_0 = arith.constant 0 : i32
    %c0_i32_1 = arith.constant 0 : i32
    return %c0_i32, %c0_i32_0 : i32, i32
  }
  func.func @transform_9(%arg0: i32) -> (i32, i32) {
    %c0_i32 = arith.constant 0 : i32
    %c0_i32_0 = arith.constant 0 : i32
    %c0_i32_1 = arith.constant 0 : i32
    return %c0_i32, %c0_i32_0 : i32, i32
  }
  func.func @transform_10(%arg0: i32) -> (i32, i32) {
    %c0_i32 = arith.constant 0 : i32
    %c0_i32_0 = arith.constant 0 : i32
    %c0_i32_1 = arith.constant 0 : i32
    return %c0_i32, %c0_i32_0 : i32, i32
  }
  func.func @transform_11(%arg0: i32) -> (i32, i32) {
    %c0_i32 = arith.constant 0 : i32
    %c0_i32_0 = arith.constant 0 : i32
    return %arg0, %c0_i32 : i32, i32
  }
}

</mosaic_0001>

<llo_original>
// kernel: tpu_custom_call.1
$region0: #{tpu_custom_call.1}
  #allocation0 [shape = 'u32[]', space=smem, size = 0x4, offset = 0x4, fixed_abs, tag = 'smem constant byte address 0x4 - core index']
  #allocation1 [shape = 'u32[72,128]{1,0:T(1,128)}', space=vmem, size = 0x9000, scoped, tag = 'internal scratch']
  %s0 = inlined_call_operand.hbm [shape: f32[200,256], index: 0, kind: input, shape index: {}]
  %s1 = inlined_call_operand.hbm [shape: f32[1,256], index: 1, kind: input, shape index: {}]
  %s2 = inlined_call_operand.hbm [shape: f32[1,256], index: 2, kind: input, shape index: {}]
  %s3 = inlined_call_operand.vmem [shape: f32[1,256], index: 3, kind: input, shape index: {}]
  %s4 = inlined_call_operand.hbm [shape: f32[1,256], index: 4, kind: input, shape index: {}]
  %s5 = inlined_call_operand.hbm [shape: f32[256,128], index: 5, kind: input, shape index: {}]
  %s6 = inlined_call_operand.vmem [shape: f32[1,128], index: 6, kind: input, shape index: {}]
  %s7 = inlined_call_operand.hbm [shape: f32[128,128], index: 7, kind: input, shape index: {}]
  %s8 = inlined_call_operand.vmem [shape: f32[1,128], index: 8, kind: input, shape index: {}]
  %s9 = inlined_call_operand.hbm [shape: f32[128,128], index: 9, kind: input, shape index: {}]
  %s10 = inlined_call_operand.vmem [shape: f32[1,128], index: 10, kind: input, shape index: {}]
  %s11 = inlined_call_operand.hbm [shape: f32[200,128], index: 11, kind: output, shape index: {}]
  %s12 = sld [smem:[#allocation0]]
  $region82: #{tpu_custom_call.1} parent=0
    _
  %s14 = ssub.s32 1, %s12
  %s15 = scalar_select 0, %s14, %s12
  $region1: #{tpu_custom_call.1} parent=0
    #allocation2 [shape = 'u8[204800]{0}', space=vmem, size = 0x32000, scoped, tag = 'input window, operand 0, single buffered']
    #allocation3 [shape = 's32[1]{0}', space=sflag, size = 0x4, scoped, tag = 'scoped memory for tpu_custom_call.1']
    #allocation4 [shape = 's32[1]{0}', space=sflag, size = 0x4, scoped, tag = 'scoped memory for tpu_custom_call.1']
    #allocation5 [shape = 'u8[1024]{0}', space=vmem, size = 0x400, scoped, tag = 'input window, operand 1, single buffered']
    #allocation6 [shape = 's32[1]{0}', space=sflag, size = 0x4, scoped, tag = 'scoped memory for tpu_custom_call.1']
    #allocation7 [shape = 'u8[1024]{0}', space=vmem, size = 0x400, scoped, tag = 'input window, operand 2, single buffered']
    #allocation8 [shape = 'u8[1024]{0}', space=vmem, size = 0x400, scoped, tag = 'input window, operand 4, single buffered']
    #allocation9 [shape = 's32[1]{0}', space=sflag, size = 0x4, scoped, tag = 'scoped memory for tpu_custom_call.1']
    #allocation10 [shape = 'u8[131072]{0}', space=vmem, size = 0x20000, scoped, tag = 'input window, operand 5, single buffered']
    #allocation11 [shape = 'u8[65536]{0}', space=vmem, size = 0x10000, scoped, tag = 'input window, operand 7, single buffered']
    #allocation12 [shape = 's32[1]{0}', space=sflag, size = 0x4, scoped, tag = 'scoped memory for tpu_custom_call.1']
    #allocation13 [shape = 'u8[65536]{0}', space=vmem, size = 0x10000, scoped, tag = 'input window, operand 9, single buffered']
    #allocation14 [shape = 'u8[102400]{0}', space=vmem, size = 0x19000, scoped, tag = 'output window, operand 0, single buffered']
    %16 = vsyncpa [#allocation3], 0
    %17 = vsyncpa [#allocation6], 0
    %18 = vsyncpa [#allocation9], 0
    %19 = vsyncpa [#allocation12], 0
    %20 = vsyncpa [#allocation4], 0
    // Predicated region
    $region2: #{tpu_custom_call.1} parent=1 // pred_check
      _
    $region3: #{tpu_custom_call.1} parent=1 // pred_check_branch
      %22 = sbr.rel (0) target = $region5
    $region4: #{tpu_custom_call.1} parent=1 // pred_region
      %24 = vsyncadd [#allocation3], 0
      %s25 = sshll.u32 %s0, 4
      %s26 = int_to_ptr.hbm [resolvable:$true] %s25
      %s27 = sshll.u32 [#allocation2], 4
      %s28 = int_to_ptr.vmem [resolvable:$true] %s27
      %33 = dma.hbm_to_vmem [thread:$0]  %s26, 6400, %s28, [#allocation3], 256, 256, 16
    $region5: #{tpu_custom_call.1} parent=1 // pred_fallthru
      _
    // Predicated region
    $region6: #{tpu_custom_call.1} parent=1 // pred_check
      _
    $region7: #{tpu_custom_call.1} parent=1 // pred_check_branch
      %35 = sbr.rel (0) target = $region9
    $region8: #{tpu_custom_call.1} parent=1 // pred_region
      %37 = vsyncadd [#allocation6], 0
      %s39 = sshll.u32 %s1, 4
      %s40 = int_to_ptr.hbm [resolvable:$true] %s39
      %s41 = sshll.u32 [#allocation5], 4
      %s42 = int_to_ptr.vmem [resolvable:$true] %s41
      %44 = dma.hbm_to_vmem [thread:$0]  %s40, 32, %s42, [#allocation6]
    $region9: #{tpu_custom_call.1} parent=1 // pred_fallthru
      _
    // Predicated region
    $region10: #{tpu_custom_call.1} parent=1 // pred_check
      _
    $region11: #{tpu_custom_call.1} parent=1 // pred_check_branch
      %46 = sbr.rel (0) target = $region13
    $region12: #{tpu_custom_call.1} parent=1 // pred_region
      %48 = vsyncadd [#allocation6], 0
      %s50 = sshll.u32 %s2, 4
      %s51 = int_to_ptr.hbm [resolvable:$true] %s50
      %s52 = sshll.u32 [#allocation7], 4
      %s53 = int_to_ptr.vmem [resolvable:$true] %s52
      %55 = dma.hbm_to_vmem [thread:$0]  %s51, 32, %s53, [#allocation6]
    $region13: #{tpu_custom_call.1} parent=1 // pred_fallthru
      _
    // Predicated region
    $region14: #{tpu_custom_call.1} parent=1 // pred_check
      _
    $region15: #{tpu_custom_call.1} parent=1 // pred_check_branch
      %57 = sbr.rel (0) target = $region17
    $region16: #{tpu_custom_call.1} parent=1 // pred_region
      _
    $region17: #{tpu_custom_call.1} parent=1 // pred_fallthru
      _
    // Predicated region
    $region18: #{tpu_custom_call.1} parent=1 // pred_check
      _
    $region19: #{tpu_custom_call.1} parent=1 // pred_check_branch
      %59 = sbr.rel (0) target = $region21
    $region20: #{tpu_custom_call.1} parent=1 // pred_region
      %61 = vsyncadd [#allocation9], 0
      %s63 = sshll.u32 %s4, 4
      %s64 = int_to_ptr.hbm [resolvable:$true] %s63
      %s65 = sshll.u32 [#allocation8], 4
      %s66 = int_to_ptr.vmem [resolvable:$true] %s65
      %68 = dma.hbm_to_vmem [thread:$0]  %s64, 32, %s66, [#allocation9]
    $region21: #{tpu_custom_call.1} parent=1 // pred_fallthru
      _
    // Predicated region
    $region22: #{tpu_custom_call.1} parent=1 // pred_check
      _
    $region23: #{tpu_custom_call.1} parent=1 // pred_check_branch
      %70 = sbr.rel (0) target = $region25
    $region24: #{tpu_custom_call.1} parent=1 // pred_region
      %72 = vsyncadd [#allocation9], 0
      %s73 = sshll.u32 %s5, 4
      %s74 = int_to_ptr.hbm [resolvable:$true] %s73
      %s75 = sshll.u32 [#allocation10], 4
      %s76 = int_to_ptr.vmem [resolvable:$true] %s75
      %81 = dma.hbm_to_vmem [thread:$0]  %s74, 4096, %s76, [#allocation9], 128, 128, 8
    $region25: #{tpu_custom_call.1} parent=1 // pred_fallthru
      _
    // Predicated region
    $region26: #{tpu_custom_call.1} parent=1 // pred_check
      _
    $region27: #{tpu_custom_call.1} parent=1 // pred_check_branch
      %83 = sbr.rel (0) target = $region29
    $region28: #{tpu_custom_call.1} parent=1 // pred_region
      _
    $region29: #{tpu_custom_call.1} parent=1 // pred_fallthru
      _
    // Predicated region
    $region30: #{tpu_custom_call.1} parent=1 // pred_check
      _
    $region31: #{tpu_custom_call.1} parent=1 // pred_check_branch
      %85 = sbr.rel (0) target = $region33
    $region32: #{tpu_custom_call.1} parent=1 // pred_region
      %87 = vsyncadd [#allocation12], 0
      %s88 = sshll.u32 %s7, 4
      %s89 = int_to_ptr.hbm [resolvable:$true] %s88
      %s90 = sshll.u32 [#allocation11], 4
      %s91 = int_to_ptr.vmem [resolvable:$true] %s90
      %96 = dma.hbm_to_vmem [thread:$0]  %s89, 2048, %s91, [#allocation12], 128, 128, 8
    $region33: #{tpu_custom_call.1} parent=1 // pred_fallthru
      _
    // Predicated region
    $region34: #{tpu_custom_call.1} parent=1 // pred_check
      _
    $region35: #{tpu_custom_call.1} parent=1 // pred_check_branch
      %98 = sbr.rel (0) target = $region37
    $region36: #{tpu_custom_call.1} parent=1 // pred_region
      _
    $region37: #{tpu_custom_call.1} parent=1 // pred_fallthru
      _
    // Predicated region
    $region38: #{tpu_custom_call.1} parent=1 // pred_check
      _
    $region39: #{tpu_custom_call.1} parent=1 // pred_check_branch
      %100 = sbr.rel (0) target = $region41
    $region40: #{tpu_custom_call.1} parent=1 // pred_region
      %102 = vsyncadd [#allocation12], 0
      %s103 = sshll.u32 %s9, 4
      %s104 = int_to_ptr.hbm [resolvable:$true] %s103
      %s105 = sshll.u32 [#allocation13], 4
      %s106 = int_to_ptr.vmem [resolvable:$true] %s105
      %111 = dma.hbm_to_vmem [thread:$0]  %s104, 2048, %s106, [#allocation12], 128, 128, 8
    $region41: #{tpu_custom_call.1} parent=1 // pred_fallthru
      _
    // Predicated region
    $region42: #{tpu_custom_call.1} parent=1 // pred_check
      _
    $region43: #{tpu_custom_call.1} parent=1 // pred_check_branch
      %113 = sbr.rel (0) target = $region45
    $region44: #{tpu_custom_call.1} parent=1 // pred_region
      _
    $region45: #{tpu_custom_call.1} parent=1 // pred_fallthru
      _
    // Predicated region
    $region46: #{tpu_custom_call.1} parent=1 // pred_check
      _
    $region47: #{tpu_custom_call.1} parent=1 // pred_check_branch
      %115 = sbr.rel (0) target = $region49
    $region48: #{tpu_custom_call.1} parent=1 // pred_region
      %117 = dma.done [#allocation3], 6400
    $region49: #{tpu_custom_call.1} parent=1 // pred_fallthru
      _
    // Predicated region
    $region50: #{tpu_custom_call.1} parent=1 // pred_check
      _
    $region51: #{tpu_custom_call.1} parent=1 // pred_check_branch
      %119 = sbr.rel (0) target = $region53
    $region52: #{tpu_custom_call.1} parent=1 // pred_region
      %121 = dma.done [#allocation6], 32
    $region53: #{tpu_custom_call.1} parent=1 // pred_fallthru
      _
    // Predicated region
    $region54: #{tpu_custom_call.1} parent=1 // pred_check
      _
    $region55: #{tpu_custom_call.1} parent=1 // pred_check_branch
      %123 = sbr.rel (0) target = $region57
    $region56: #{tpu_custom_call.1} parent=1 // pred_region
      %125 = dma.done [#allocation6], 32
    $region57: #{tpu_custom_call.1} parent=1 // pred_fallthru
      _
    // Predicated region
    $region58: #{tpu_custom_call.1} parent=1 // pred_check
      _
    $region59: #{tpu_custom_call.1} parent=1 // pred_check_branch
      %127 = sbr.rel (0) target = $region61
    $region60: #{tpu_custom_call.1} parent=1 // pred_region
      %129 = dma.done [#allocation9], 32
    $region61: #{tpu_custom_call.1} parent=1 // pred_fallthru
      _
    // Predicated region
    $region62: #{tpu_custom_call.1} parent=1 // pred_check
      _
    $region63: #{tpu_custom_call.1} parent=1 // pred_check_branch
      %131 = sbr.rel (0) target = $region65
    $region64: #{tpu_custom_call.1} parent=1 // pred_region
      %133 = dma.done [#allocation9], 4096
    $region65: #{tpu_custom_call.1} parent=1 // pred_fallthru
      _
    // Predicated region
    $region66: #{tpu_custom_call.1} parent=1 // pred_check
      _
    $region67: #{tpu_custom_call.1} parent=1 // pred_check_branch
      %135 = sbr.rel (0) target = $region69
    $region68: #{tpu_custom_call.1} parent=1 // pred_region
      %137 = dma.done [#allocation12], 2048
    $region69: #{tpu_custom_call.1} parent=1 // pred_fallthru
      _
    // Predicated region
    $region70: #{tpu_custom_call.1} parent=1 // pred_check
      _
    $region71: #{tpu_custom_call.1} parent=1 // pred_check_branch
      %139 = sbr.rel (0) target = $region73
    $region72: #{tpu_custom_call.1} parent=1 // pred_region
      %141 = dma.done [#allocation12], 2048
    $region73: #{tpu_custom_call.1} parent=1 // pred_fallthru
      _
    %v142 = vld [vmem:[#allocation2] sm:$0xff]
    %v143 = vld [vmem:[#allocation2 + $0x8] sm:$0xff]
    %v144 = vld [vmem:[#allocation2 + $0x10] sm:$0xff]
    %v145 = vld [vmem:[#allocation2 + $0x18] sm:$0xff]
    %v146 = vld [vmem:[#allocation2 + $0x20] sm:$0xff]
    %v147 = vld [vmem:[#allocation2 + $0x28] sm:$0xff]
    %v148 = vld [vmem:[#allocation2 + $0x30] sm:$0xff]
    %v149 = vld [vmem:[#allocation2 + $0x38] sm:$0xff]
    %v150 = vld [vmem:[#allocation2 + $0x40] sm:$0xff]
    %v151 = vld [vmem:[#allocation2 + $0x48] sm:$0xff]
    %v152 = vld [vmem:[#allocation2 + $0x50] sm:$0xff]
    %v153 = vld [vmem:[#allocation2 + $0x58] sm:$0xff]
    %v154 = vld [vmem:[#allocation2 + $0x60] sm:$0xff]
    %v155 = vld [vmem:[#allocation2 + $0x68] sm:$0xff]
    %v156 = vld [vmem:[#allocation2 + $0x70] sm:$0xff]
    %v157 = vld [vmem:[#allocation2 + $0x78] sm:$0xff]
    %v158 = vld [vmem:[#allocation2 + $0x80] sm:$0xff]
    %v159 = vld [vmem:[#allocation2 + $0x88] sm:$0xff]
    %v160 = vld [vmem:[#allocation2 + $0x90] sm:$0xff]
    %v161 = vld [vmem:[#allocation2 + $0x98] sm:$0xff]
    %v162 = vld [vmem:[#allocation2 + $0xa0] sm:$0xff]
    %v163 = vld [vmem:[#allocation2 + $0xa8] sm:$0xff]
    %v164 = vld [vmem:[#allocation2 + $0xb0] sm:$0xff]
    %v165 = vld [vmem:[#allocation2 + $0xb8] sm:$0xff]
    %v166 = vld [vmem:[#allocation2 + $0xc0] sm:$0xff]
    %v167 = vld [vmem:[#allocation2 + $0xc8] sm:$0xff]
    %v168 = vld [vmem:[#allocation2 + $0xd0] sm:$0xff]
    %v169 = vld [vmem:[#allocation2 + $0xd8] sm:$0xff]
    %v170 = vld [vmem:[#allocation2 + $0xe0] sm:$0xff]
    %v171 = vld [vmem:[#allocation2 + $0xe8] sm:$0xff]
    %v172 = vld [vmem:[#allocation2 + $0xf0] sm:$0xff]
    %v173 = vld [vmem:[#allocation2 + $0xf8] sm:$0xff]
    %v174 = vld [vmem:[#allocation2 + $0x100] sm:$0xff]
    %v175 = vld [vmem:[#allocation2 + $0x108] sm:$0xff]
    %v176 = vld [vmem:[#allocation2 + $0x110] sm:$0xff]
    %v177 = vld [vmem:[#allocation2 + $0x118] sm:$0xff]
    %v178 = vld [vmem:[#allocation2 + $0x120] sm:$0xff]
    %v179 = vld [vmem:[#allocation2 + $0x128] sm:$0xff]
    %v180 = vld [vmem:[#allocation2 + $0x130] sm:$0xff]
    %v181 = vld [vmem:[#allocation2 + $0x138] sm:$0xff]
    %v182 = vld [vmem:[#allocation2 + $0x140] sm:$0xff]
    %v183 = vld [vmem:[#allocation2 + $0x148] sm:$0xff]
    %v184 = vld [vmem:[#allocation2 + $0x150] sm:$0xff]
    %v185 = vld [vmem:[#allocation2 + $0x158] sm:$0xff]
    %v186 = vld [vmem:[#allocation2 + $0x160] sm:$0xff]
    %v187 = vld [vmem:[#allocation2 + $0x168] sm:$0xff]
    %v188 = vld [vmem:[#allocation2 + $0x170] sm:$0xff]
    %v189 = vld [vmem:[#allocation2 + $0x178] sm:$0xff]
    %v190 = vld [vmem:[#allocation2 + $0x180] sm:$0xff]
    %v191 = vld [vmem:[#allocation2 + $0x188] sm:$0xff]
    %v192 = vld [vmem:[#allocation5] sm:$0x3]
    %v193 = vld [vmem:[#allocation8] sm:$0x3]
    %v194 = vadd.f32 %v193, 1e-05
    %v195 = vrsqrt.pop %v194
    %v196 = vmul.f32 %v195, %v194
    %v197 = vmul.f32 %v196, %v195
    %v198 = vmul.f32 0.5, %v197
    %v199 = vsub.f32 1.5, %v198
    %v200 = vmul.f32 %v195, %v199
    %vm201 = vweird.f32 %v194
    %vm202 = vweird.f32 %v195
    %vm203 = vmor %vm201, %vm202
    %v204 = vsel %vm203, %v195, %v200
    %v205 = vmul.f32 %v192, %v204
    %v206 = vld [vmem:[#allocation7] sm:$0x3]
    %v207 = vld [vmem:[%s3] sm:$0x3]
    %v208 = vmul.f32 %v207, %v205
    %v209 = vsub.f32 %v206, %v208
    %v211 = vperm.slane %v205, 0
    %v212 = vperm.slane %v205, 1
    %v215 = vmul.f32 %v142, %v211
    %v216 = vmul.f32 %v143, %v212
    %v217 = vmul.f32 %v144, %v211
    %v218 = vmul.f32 %v145, %v212
    %v219 = vmul.f32 %v146, %v211
    %v220 = vmul.f32 %v147, %v212
    %v221 = vmul.f32 %v148, %v211
    %v222 = vmul.f32 %v149, %v212
    %v223 = vmul.f32 %v150, %v211
    %v224 = vmul.f32 %v151, %v212
    %v225 = vmul.f32 %v152, %v211
    %v226 = vmul.f32 %v153, %v212
    %v227 = vmul.f32 %v154, %v211
    %v228 = vmul.f32 %v155, %v212
    %v229 = vmul.f32 %v156, %v211
    %v230 = vmul.f32 %v157, %v212
    %v231 = vmul.f32 %v158, %v211
    %v232 = vmul.f32 %v159, %v212
    %v233 = vmul.f32 %v160, %v211
    %v234 = vmul.f32 %v161, %v212
    %v235 = vmul.f32 %v162, %v211
    %v236 = vmul.f32 %v163, %v212
    %v237 = vmul.f32 %v164, %v211
    %v238 = vmul.f32 %v165, %v212
    %v239 = vmul.f32 %v166, %v211
    %v240 = vmul.f32 %v167, %v212
    %v241 = vmul.f32 %v168, %v211
    %v242 = vmul.f32 %v169, %v212
    %v243 = vmul.f32 %v170, %v211
    %v244 = vmul.f32 %v171, %v212
    %v245 = vmul.f32 %v172, %v211
    %v246 = vmul.f32 %v173, %v212
    %v247 = vmul.f32 %v174, %v211
    %v248 = vmul.f32 %v175, %v212
    %v249 = vmul.f32 %v176, %v211
    %v250 = vmul.f32 %v177, %v212
    %v251 = vmul.f32 %v178, %v211
    %v252 = vmul.f32 %v179, %v212
    %v253 = vmul.f32 %v180, %v211
    %v254 = vmul.f32 %v181, %v212
    %v255 = vmul.f32 %v182, %v211
    %v256 = vmul.f32 %v183, %v212
    %v257 = vmul.f32 %v184, %v211
    %v258 = vmul.f32 %v185, %v212
    %v259 = vmul.f32 %v186, %v211
    %v260 = vmul.f32 %v187, %v212
    %v261 = vmul.f32 %v188, %v211
    %v262 = vmul.f32 %v189, %v212
    %v263 = vmul.f32 %v190, %v211
    %v264 = vmul.f32 %v191, %v212
    %v266 = vperm.slane %v209, 0
    %v267 = vperm.slane %v209, 1
    %v270 = vadd.f32 %v215, %v266
    %v271 = vadd.f32 %v216, %v267
    %v272 = vadd.f32 %v217, %v266
    %v273 = vadd.f32 %v218, %v267
    %v274 = vadd.f32 %v219, %v266
    %v275 = vadd.f32 %v220, %v267
    %v276 = vadd.f32 %v221, %v266
    %v277 = vadd.f32 %v222, %v267
    %v278 = vadd.f32 %v223, %v266
    %v279 = vadd.f32 %v224, %v267
    %v280 = vadd.f32 %v225, %v266
    %v281 = vadd.f32 %v226, %v267
    %v282 = vadd.f32 %v227, %v266
    %v283 = vadd.f32 %v228, %v267
    %v284 = vadd.f32 %v229, %v266
    %v285 = vadd.f32 %v230, %v267
    %v286 = vadd.f32 %v231, %v266
    %v287 = vadd.f32 %v232, %v267
    %v288 = vadd.f32 %v233, %v266
    %v289 = vadd.f32 %v234, %v267
    %v290 = vadd.f32 %v235, %v266
    %v291 = vadd.f32 %v236, %v267
    %v292 = vadd.f32 %v237, %v266
    %v293 = vadd.f32 %v238, %v267
    %v294 = vadd.f32 %v239, %v266
    %v295 = vadd.f32 %v240, %v267
    %v296 = vadd.f32 %v241, %v266
    %v297 = vadd.f32 %v242, %v267
    %v298 = vadd.f32 %v243, %v266
    %v299 = vadd.f32 %v244, %v267
    %v300 = vadd.f32 %v245, %v266
    %v301 = vadd.f32 %v246, %v267
    %v302 = vadd.f32 %v247, %v266
    %v303 = vadd.f32 %v248, %v267
    %v304 = vadd.f32 %v249, %v266
    %v305 = vadd.f32 %v250, %v267
    %v306 = vadd.f32 %v251, %v266
    %v307 = vadd.f32 %v252, %v267
    %v308 = vadd.f32 %v253, %v266
    %v309 = vadd.f32 %v254, %v267
    %v310 = vadd.f32 %v255, %v266
    %v311 = vadd.f32 %v256, %v267
    %v312 = vadd.f32 %v257, %v266
    %v313 = vadd.f32 %v258, %v267
    %v314 = vadd.f32 %v259, %v266
    %v315 = vadd.f32 %v260, %v267
    %v316 = vadd.f32 %v261, %v266
    %v317 = vadd.f32 %v262, %v267
    %v318 = vadd.f32 %v263, %v266
    %v319 = vadd.f32 %v264, %v267
    %v320 = vld [vmem:[#allocation10] sm:$0xff]
    %v321 = vld [vmem:[#allocation10 + $0x8] sm:$0xff]
    %v322 = vld [vmem:[#allocation10 + $0x10] sm:$0xff]
    %v323 = vld [vmem:[#allocation10 + $0x18] sm:$0xff]
    %v324 = vld [vmem:[#allocation10 + $0x20] sm:$0xff]
    %v325 = vld [vmem:[#allocation10 + $0x28] sm:$0xff]
    %v326 = vld [vmem:[#allocation10 + $0x30] sm:$0xff]
    %v327 = vld [vmem:[#allocation10 + $0x38] sm:$0xff]
    %v328 = vld [vmem:[#allocation10 + $0x40] sm:$0xff]
    %v329 = vld [vmem:[#allocation10 + $0x48] sm:$0xff]
    %v330 = vld [vmem:[#allocation10 + $0x50] sm:$0xff]
    %v331 = vld [vmem:[#allocation10 + $0x58] sm:$0xff]
    %v332 = vld [vmem:[#allocation10 + $0x60] sm:$0xff]
    %v333 = vld [vmem:[#allocation10 + $0x68] sm:$0xff]
    %v334 = vld [vmem:[#allocation10 + $0x70] sm:$0xff]
    %v335 = vld [vmem:[#allocation10 + $0x78] sm:$0xff]
    %v336 = vld [vmem:[#allocation10 + $0x80] sm:$0xff]
    %v337 = vld [vmem:[#allocation10 + $0x88] sm:$0xff]
    %v338 = vld [vmem:[#allocation10 + $0x90] sm:$0xff]
    %v339 = vld [vmem:[#allocation10 + $0x98] sm:$0xff]
    %v340 = vld [vmem:[#allocation10 + $0xa0] sm:$0xff]
    %v341 = vld [vmem:[#allocation10 + $0xa8] sm:$0xff]
    %v342 = vld [vmem:[#allocation10 + $0xb0] sm:$0xff]
    %v343 = vld [vmem:[#allocation10 + $0xb8] sm:$0xff]
    %v344 = vld [vmem:[#allocation10 + $0xc0] sm:$0xff]
    %v345 = vld [vmem:[#allocation10 + $0xc8] sm:$0xff]
    %v346 = vld [vmem:[#allocation10 + $0xd0] sm:$0xff]
    %v347 = vld [vmem:[#allocation10 + $0xd8] sm:$0xff]
    %v348 = vld [vmem:[#allocation10 + $0xe0] sm:$0xff]
    %v349 = vld [vmem:[#allocation10 + $0xe8] sm:$0xff]
    %v350 = vld [vmem:[#allocation10 + $0xf0] sm:$0xff]
    %v351 = vld [vmem:[#allocation10 + $0xf8] sm:$0xff]
    %v352 = vld [vmem:[%s6] sm:$0x1]
    %v354 = vperm.slane %v352, 0
    %356 = vmatpush.msra.mxu0 %v335
    %357 = vmatpush.msra.mxu0 %v334
    %358 = vmatpush.msra.mxu0 %v333
    %359 = vmatpush.msra.mxu0 %v332
    %360 = vmatpush.msra.mxu0 %v331
    %361 = vmatpush.msra.mxu0 %v330
    %362 = vmatpush.msra.mxu0 %v329
    %363 = vmatpush.msra.mxu0 %v328
    %364 = vmatpush.msra.mxu0 %v327
    %365 = vmatpush.msra.mxu0 %v326
    %366 = vmatpush.msra.mxu0 %v325
    %367 = vmatpush.msra.mxu0 %v324
    %368 = vmatpush.msra.mxu0 %v323
    %369 = vmatpush.msra.mxu0 %v322
    %370 = vmatpush.msra.mxu0 %v321
    %371 = vmatpush.msra.mxu0 %v320
    %372 = vmatmul.f32.gmra.mxu0 %v270
    %v373 = vpop.f32.mrf.mxu0
    %v374 = vadd.f32 %v354, %v373
    %375 = vmatmul.f32.gmra.mxu0 %v272
    %v376 = vpop.f32.mrf.mxu0
    %v377 = vadd.f32 %v354, %v376
    %378 = vmatmul.f32.gmra.mxu0 %v274
    %v379 = vpop.f32.mrf.mxu0
    %v380 = vadd.f32 %v354, %v379
    %381 = vmatmul.f32.gmra.mxu0 %v276
    %v382 = vpop.f32.mrf.mxu0
    %v383 = vadd.f32 %v354, %v382
    %384 = vmatmul.f32.gmra.mxu0 %v278
    %v385 = vpop.f32.mrf.mxu0
    %v386 = vadd.f32 %v354, %v385
    %387 = vmatmul.f32.gmra.mxu0 %v280
    %v388 = vpop.f32.mrf.mxu0
    %v389 = vadd.f32 %v354, %v388
    %390 = vmatmul.f32.gmra.mxu0 %v282
    %v391 = vpop.f32.mrf.mxu0
    %v392 = vadd.f32 %v354, %v391
    %393 = vmatmul.f32.gmra.mxu0 %v284
    %v394 = vpop.f32.mrf.mxu0
    %v395 = vadd.f32 %v354, %v394
    %396 = vmatmul.f32.gmra.mxu0 %v286
    %v397 = vpop.f32.mrf.mxu0
    %v398 = vadd.f32 %v354, %v397
    %399 = vmatmul.f32.gmra.mxu0 %v288
    %v400 = vpop.f32.mrf.mxu0
    %v401 = vadd.f32 %v354, %v400
    %402 = vmatmul.f32.gmra.mxu0 %v290
    %v403 = vpop.f32.mrf.mxu0
    %v404 = vadd.f32 %v354, %v403
    %405 = vmatmul.f32.gmra.mxu0 %v292
    %v406 = vpop.f32.mrf.mxu0
    %v407 = vadd.f32 %v354, %v406
    %408 = vmatmul.f32.gmra.mxu0 %v294
    %v409 = vpop.f32.mrf.mxu0
    %v410 = vadd.f32 %v354, %v409
    %411 = vmatmul.f32.gmra.mxu0 %v296
    %v412 = vpop.f32.mrf.mxu0
    %v413 = vadd.f32 %v354, %v412
    %414 = vmatmul.f32.gmra.mxu0 %v298
    %v415 = vpop.f32.mrf.mxu0
    %v416 = vadd.f32 %v354, %v415
    %417 = vmatmul.f32.gmra.mxu0 %v300
    %v418 = vpop.f32.mrf.mxu0
    %v419 = vadd.f32 %v354, %v418
    %420 = vmatmul.f32.gmra.mxu0 %v302
    %v421 = vpop.f32.mrf.mxu0
    %v422 = vadd.f32 %v354, %v421
    %423 = vmatmul.f32.gmra.mxu0 %v304
    %v424 = vpop.f32.mrf.mxu0
    %v425 = vadd.f32 %v354, %v424
    %426 = vmatmul.f32.gmra.mxu0 %v306
    %v427 = vpop.f32.mrf.mxu0
    %v428 = vadd.f32 %v354, %v427
    %429 = vmatmul.f32.gmra.mxu0 %v308
    %v430 = vpop.f32.mrf.mxu0
    %v431 = vadd.f32 %v354, %v430
    %432 = vmatmul.f32.gmra.mxu0 %v310
    %v433 = vpop.f32.mrf.mxu0
    %v434 = vadd.f32 %v354, %v433
    %435 = vmatmul.f32.gmra.mxu0 %v312
    %v436 = vpop.f32.mrf.mxu0
    %v437 = vadd.f32 %v354, %v436
    %438 = vmatmul.f32.gmra.mxu0 %v314
    %v439 = vpop.f32.mrf.mxu0
    %v440 = vadd.f32 %v354, %v439
    %441 = vmatmul.f32.gmra.mxu0 %v316
    %v442 = vpop.f32.mrf.mxu0
    %v443 = vadd.f32 %v354, %v442
    %444 = vmatmul.f32.gmra.mxu0 %v318
    %v445 = vpop.f32.mrf.mxu0
    %v446 = vadd.f32 %v354, %v445
    %447 = vdwg.mxu0
    %448 = vmatpush.msra.mxu0 %v351
    %449 = vmatpush.msra.mxu0 %v350
    %450 = vmatpush.msra.mxu0 %v349
    %451 = vmatpush.msra.mxu0 %v348
    %452 = vmatpush.msra.mxu0 %v347
    %453 = vmatpush.msra.mxu0 %v346
    %454 = vmatpush.msra.mxu0 %v345
    %455 = vmatpush.msra.mxu0 %v344
    %456 = vmatpush.msra.mxu0 %v343
    %457 = vmatpush.msra.mxu0 %v342
    %458 = vmatpush.msra.mxu0 %v341
    %459 = vmatpush.msra.mxu0 %v340
    %460 = vmatpush.msra.mxu0 %v339
    %461 = vmatpush.msra.mxu0 %v338
    %462 = vmatpush.msra.mxu0 %v337
    %463 = vmatpush.msra.mxu0 %v336
    %464 = vmatmul.f32.gmra.mxu0 %v271
    %v465 = vpop.f32.mrf.mxu0
    %v466 = vadd.f32 %v374, %v465
    %467 = vmatmul.f32.gmra.mxu0 %v273
    %v468 = vpop.f32.mrf.mxu0
    %v469 = vadd.f32 %v377, %v468
    %470 = vmatmul.f32.gmra.mxu0 %v275
    %v471 = vpop.f32.mrf.mxu0
    %v472 = vadd.f32 %v380, %v471
    %473 = vmatmul.f32.gmra.mxu0 %v277
    %v474 = vpop.f32.mrf.mxu0
    %v475 = vadd.f32 %v383, %v474
    %476 = vmatmul.f32.gmra.mxu0 %v279
    %v477 = vpop.f32.mrf.mxu0
    %v478 = vadd.f32 %v386, %v477
    %479 = vmatmul.f32.gmra.mxu0 %v281
    %v480 = vpop.f32.mrf.mxu0
    %v481 = vadd.f32 %v389, %v480
    %482 = vmatmul.f32.gmra.mxu0 %v283
    %v483 = vpop.f32.mrf.mxu0
    %v484 = vadd.f32 %v392, %v483
    %485 = vmatmul.f32.gmra.mxu0 %v285
    %v486 = vpop.f32.mrf.mxu0
    %v487 = vadd.f32 %v395, %v486
    %488 = vmatmul.f32.gmra.mxu0 %v287
    %v489 = vpop.f32.mrf.mxu0
    %v490 = vadd.f32 %v398, %v489
    %491 = vmatmul.f32.gmra.mxu0 %v289
    %v492 = vpop.f32.mrf.mxu0
    %v493 = vadd.f32 %v401, %v492
    %494 = vmatmul.f32.gmra.mxu0 %v291
    %v495 = vpop.f32.mrf.mxu0
    %v496 = vadd.f32 %v404, %v495
    %497 = vmatmul.f32.gmra.mxu0 %v293
    %v498 = vpop.f32.mrf.mxu0
    %v499 = vadd.f32 %v407, %v498
    %500 = vmatmul.f32.gmra.mxu0 %v295
    %v501 = vpop.f32.mrf.mxu0
    %v502 = vadd.f32 %v410, %v501
    %503 = vmatmul.f32.gmra.mxu0 %v297
    %v504 = vpop.f32.mrf.mxu0
    %v505 = vadd.f32 %v413, %v504
    %506 = vmatmul.f32.gmra.mxu0 %v299
    %v507 = vpop.f32.mrf.mxu0
    %v508 = vadd.f32 %v416, %v507
    %509 = vmatmul.f32.gmra.mxu0 %v301
    %v510 = vpop.f32.mrf.mxu0
    %v511 = vadd.f32 %v419, %v510
    %512 = vmatmul.f32.gmra.mxu0 %v303
    %v513 = vpop.f32.mrf.mxu0
    %v514 = vadd.f32 %v422, %v513
    %515 = vmatmul.f32.gmra.mxu0 %v305
    %v516 = vpop.f32.mrf.mxu0
    %v517 = vadd.f32 %v425, %v516
    %518 = vmatmul.f32.gmra.mxu0 %v307
    %v519 = vpop.f32.mrf.mxu0
    %v520 = vadd.f32 %v428, %v519
    %521 = vmatmul.f32.gmra.mxu0 %v309
    %v522 = vpop.f32.mrf.mxu0
    %v523 = vadd.f32 %v431, %v522
    %524 = vmatmul.f32.gmra.mxu0 %v311
    %v525 = vpop.f32.mrf.mxu0
    %v526 = vadd.f32 %v434, %v525
    %527 = vmatmul.f32.gmra.mxu0 %v313
    %v528 = vpop.f32.mrf.mxu0
    %v529 = vadd.f32 %v437, %v528
    %530 = vmatmul.f32.gmra.mxu0 %v315
    %v531 = vpop.f32.mrf.mxu0
    %v532 = vadd.f32 %v440, %v531
    %533 = vmatmul.f32.gmra.mxu0 %v317
    %v534 = vpop.f32.mrf.mxu0
    %v535 = vadd.f32 %v443, %v534
    %536 = vmatmul.f32.gmra.mxu0 %v319
    %v537 = vpop.f32.mrf.mxu0
    %v538 = vadd.f32 %v446, %v537
    %539 = vdwg.mxu0
    %v540 = vmax.f32 %v466, 0.0
    %v541 = vmax.f32 %v469, 0.0
    %v542 = vmax.f32 %v472, 0.0
    %v543 = vmax.f32 %v475, 0.0
    %v544 = vmax.f32 %v478, 0.0
    %v545 = vmax.f32 %v481, 0.0
    %v546 = vmax.f32 %v484, 0.0
    %v547 = vmax.f32 %v487, 0.0
    %v548 = vmax.f32 %v490, 0.0
    %v549 = vmax.f32 %v493, 0.0
    %v550 = vmax.f32 %v496, 0.0
    %v551 = vmax.f32 %v499, 0.0
    %v552 = vmax.f32 %v502, 0.0
    %v553 = vmax.f32 %v505, 0.0
    %v554 = vmax.f32 %v508, 0.0
    %v555 = vmax.f32 %v511, 0.0
    %v556 = vmax.f32 %v514, 0.0
    %v557 = vmax.f32 %v517, 0.0
    %v558 = vmax.f32 %v520, 0.0
    %v559 = vmax.f32 %v523, 0.0
    %v560 = vmax.f32 %v526, 0.0
    %v561 = vmax.f32 %v529, 0.0
    %v562 = vmax.f32 %v532, 0.0
    %v563 = vmax.f32 %v535, 0.0
    %v564 = vmax.f32 %v538, 0.0
    %v565 = vld [vmem:[#allocation11] sm:$0xff]
    %v566 = vld [vmem:[#allocation11 + $0x8] sm:$0xff]
    %v567 = vld [vmem:[#allocation11 + $0x10] sm:$0xff]
    %v568 = vld [vmem:[#allocation11 + $0x18] sm:$0xff]
    %v569 = vld [vmem:[#allocation11 + $0x20] sm:$0xff]
    %v570 = vld [vmem:[#allocation11 + $0x28] sm:$0xff]
    %v571 = vld [vmem:[#allocation11 + $0x30] sm:$0xff]
    %v572 = vld [vmem:[#allocation11 + $0x38] sm:$0xff]
    %v573 = vld [vmem:[#allocation11 + $0x40] sm:$0xff]
    %v574 = vld [vmem:[#allocation11 + $0x48] sm:$0xff]
    %v575 = vld [vmem:[#allocation11 + $0x50] sm:$0xff]
    %v576 = vld [vmem:[#allocation11 + $0x58] sm:$0xff]
    %v577 = vld [vmem:[#allocation11 + $0x60] sm:$0xff]
    %v578 = vld [vmem:[#allocation11 + $0x68] sm:$0xff]
    %v579 = vld [vmem:[#allocation11 + $0x70] sm:$0xff]
    %v580 = vld [vmem:[#allocation11 + $0x78] sm:$0xff]
    %v581 = vld [vmem:[%s8] sm:$0x1]
    %v583 = vperm.slane %v581, 0
    %585 = vmatpush.msra.mxu0 %v580
    %586 = vmatpush.msra.mxu0 %v579
    %587 = vmatpush.msra.mxu0 %v578
    %588 = vmatpush.msra.mxu0 %v577
    %589 = vmatpush.msra.mxu0 %v576
    %590 = vmatpush.msra.mxu0 %v575
    %591 = vmatpush.msra.mxu0 %v574
    %592 = vmatpush.msra.mxu0 %v573
    %593 = vmatpush.msra.mxu0 %v572
    %594 = vmatpush.msra.mxu0 %v571
    %595 = vmatpush.msra.mxu0 %v570
    %596 = vmatpush.msra.mxu0 %v569
    %597 = vmatpush.msra.mxu0 %v568
    %598 = vmatpush.msra.mxu0 %v567
    %599 = vmatpush.msra.mxu0 %v566
    %600 = vmatpush.msra.mxu0 %v565
    %601 = vmatmul.f32.gmra.mxu0 %v540
    %v602 = vpop.f32.mrf.mxu0
    %v603 = vadd.f32 %v583, %v602
    %604 = vmatmul.f32.gmra.mxu0 %v541
    %v605 = vpop.f32.mrf.mxu0
    %v606 = vadd.f32 %v583, %v605
    %607 = vmatmul.f32.gmra.mxu0 %v542
    %v608 = vpop.f32.mrf.mxu0
    %v609 = vadd.f32 %v583, %v608
    %610 = vmatmul.f32.gmra.mxu0 %v543
    %v611 = vpop.f32.mrf.mxu0
    %v612 = vadd.f32 %v583, %v611
    %613 = vmatmul.f32.gmra.mxu0 %v544
    %v614 = vpop.f32.mrf.mxu0
    %v615 = vadd.f32 %v583, %v614
    %616 = vmatmul.f32.gmra.mxu0 %v545
    %v617 = vpop.f32.mrf.mxu0
    %v618 = vadd.f32 %v583, %v617
    %619 = vmatmul.f32.gmra.mxu0 %v546
    %v620 = vpop.f32.mrf.mxu0
    %v621 = vadd.f32 %v583, %v620
    %622 = vmatmul.f32.gmra.mxu0 %v547
    %v623 = vpop.f32.mrf.mxu0
    %v624 = vadd.f32 %v583, %v623
    %625 = vmatmul.f32.gmra.mxu0 %v548
    %v626 = vpop.f32.mrf.mxu0
    %v627 = vadd.f32 %v583, %v626
    %628 = vmatmul.f32.gmra.mxu0 %v549
    %v629 = vpop.f32.mrf.mxu0
    %v630 = vadd.f32 %v583, %v629
    %631 = vmatmul.f32.gmra.mxu0 %v550
    %v632 = vpop.f32.mrf.mxu0
    %v633 = vadd.f32 %v583, %v632
    %634 = vmatmul.f32.gmra.mxu0 %v551
    %v635 = vpop.f32.mrf.mxu0
    %v636 = vadd.f32 %v583, %v635
    %637 = vmatmul.f32.gmra.mxu0 %v552
    %v638 = vpop.f32.mrf.mxu0
    %v639 = vadd.f32 %v583, %v638
    %640 = vmatmul.f32.gmra.mxu0 %v553
    %v641 = vpop.f32.mrf.mxu0
    %v642 = vadd.f32 %v583, %v641
    %643 = vmatmul.f32.gmra.mxu0 %v554
    %v644 = vpop.f32.mrf.mxu0
    %v645 = vadd.f32 %v583, %v644
    %646 = vmatmul.f32.gmra.mxu0 %v555
    %v647 = vpop.f32.mrf.mxu0
    %v648 = vadd.f32 %v583, %v647
    %649 = vmatmul.f32.gmra.mxu0 %v556
    %v650 = vpop.f32.mrf.mxu0
    %v651 = vadd.f32 %v583, %v650
    %652 = vmatmul.f32.gmra.mxu0 %v557
    %v653 = vpop.f32.mrf.mxu0
    %v654 = vadd.f32 %v583, %v653
    %655 = vmatmul.f32.gmra.mxu0 %v558
    %v656 = vpop.f32.mrf.mxu0
    %v657 = vadd.f32 %v583, %v656
    %658 = vmatmul.f32.gmra.mxu0 %v559
    %v659 = vpop.f32.mrf.mxu0
    %v660 = vadd.f32 %v583, %v659
    %661 = vmatmul.f32.gmra.mxu0 %v560
    %v662 = vpop.f32.mrf.mxu0
    %v663 = vadd.f32 %v583, %v662
    %664 = vmatmul.f32.gmra.mxu0 %v561
    %v665 = vpop.f32.mrf.mxu0
    %v666 = vadd.f32 %v583, %v665
    %667 = vmatmul.f32.gmra.mxu0 %v562
    %v668 = vpop.f32.mrf.mxu0
    %v669 = vadd.f32 %v583, %v668
    %670 = vmatmul.f32.gmra.mxu0 %v563
    %v671 = vpop.f32.mrf.mxu0
    %v672 = vadd.f32 %v583, %v671
    %673 = vmatmul.f32.gmra.mxu0 %v564
    %v674 = vpop.f32.mrf.mxu0
    %v675 = vadd.f32 %v583, %v674
    %676 = vdwg.mxu0
    %v677 = vmax.f32 %v603, 0.0
    %v678 = vmax.f32 %v606, 0.0
    %v679 = vmax.f32 %v609, 0.0
    %v680 = vmax.f32 %v612, 0.0
    %v681 = vmax.f32 %v615, 0.0
    %v682 = vmax.f32 %v618, 0.0
    %v683 = vmax.f32 %v621, 0.0
    %v684 = vmax.f32 %v624, 0.0
    %v685 = vmax.f32 %v627, 0.0
    %v686 = vmax.f32 %v630, 0.0
    %v687 = vmax.f32 %v633, 0.0
    %v688 = vmax.f32 %v636, 0.0
    %v689 = vmax.f32 %v639, 0.0
    %v690 = vmax.f32 %v642, 0.0
    %v691 = vmax.f32 %v645, 0.0
    %v692 = vmax.f32 %v648, 0.0
    %v693 = vmax.f32 %v651, 0.0
    %v694 = vmax.f32 %v654, 0.0
    %v695 = vmax.f32 %v657, 0.0
    %v696 = vmax.f32 %v660, 0.0
    %v697 = vmax.f32 %v663, 0.0
    %v698 = vmax.f32 %v666, 0.0
    %v699 = vmax.f32 %v669, 0.0
    %v700 = vmax.f32 %v672, 0.0
    %v701 = vmax.f32 %v675, 0.0
    %v702 = vld [vmem:[#allocation13] sm:$0xff]
    %v703 = vld [vmem:[#allocation13 + $0x8] sm:$0xff]
    %v704 = vld [vmem:[#allocation13 + $0x10] sm:$0xff]
    %v705 = vld [vmem:[#allocation13 + $0x18] sm:$0xff]
    %v706 = vld [vmem:[#allocation13 + $0x20] sm:$0xff]
    %v707 = vld [vmem:[#allocation13 + $0x28] sm:$0xff]
    %v708 = vld [vmem:[#allocation13 + $0x30] sm:$0xff]
    %v709 = vld [vmem:[#allocation13 + $0x38] sm:$0xff]
    %v710 = vld [vmem:[#allocation13 + $0x40] sm:$0xff]
    %v711 = vld [vmem:[#allocation13 + $0x48] sm:$0xff]
    %v712 = vld [vmem:[#allocation13 + $0x50] sm:$0xff]
    %v713 = vld [vmem:[#allocation13 + $0x58] sm:$0xff]
    %v714 = vld [vmem:[#allocation13 + $0x60] sm:$0xff]
    %v715 = vld [vmem:[#allocation13 + $0x68] sm:$0xff]
    %v716 = vld [vmem:[#allocation13 + $0x70] sm:$0xff]
    %v717 = vld [vmem:[#allocation13 + $0x78] sm:$0xff]
    %v718 = vld [vmem:[%s10] sm:$0x1]
    %v720 = vperm.slane %v718, 0
    %722 = vmatpush.msra.mxu0 %v717
    %723 = vmatpush.msra.mxu0 %v716
    %724 = vmatpush.msra.mxu0 %v715
    %725 = vmatpush.msra.mxu0 %v714
    %726 = vmatpush.msra.mxu0 %v713
    %727 = vmatpush.msra.mxu0 %v712
    %728 = vmatpush.msra.mxu0 %v711
    %729 = vmatpush.msra.mxu0 %v710
    %730 = vmatpush.msra.mxu0 %v709
    %731 = vmatpush.msra.mxu0 %v708
    %732 = vmatpush.msra.mxu0 %v707
    %733 = vmatpush.msra.mxu0 %v706
    %734 = vmatpush.msra.mxu0 %v705
    %735 = vmatpush.msra.mxu0 %v704
    %736 = vmatpush.msra.mxu0 %v703
    %737 = vmatpush.msra.mxu0 %v702
    %738 = vmatmul.f32.gmra.mxu0 %v677
    %v739 = vpop.f32.mrf.mxu0
    %v740 = vadd.f32 %v720, %v739
    %741 = vmatmul.f32.gmra.mxu0 %v678
    %v742 = vpop.f32.mrf.mxu0
    %v743 = vadd.f32 %v720, %v742
    %744 = vmatmul.f32.gmra.mxu0 %v679
    %v745 = vpop.f32.mrf.mxu0
    %v746 = vadd.f32 %v720, %v745
    %747 = vmatmul.f32.gmra.mxu0 %v680
    %v748 = vpop.f32.mrf.mxu0
    %v749 = vadd.f32 %v720, %v748
    %750 = vmatmul.f32.gmra.mxu0 %v681
    %v751 = vpop.f32.mrf.mxu0
    %v752 = vadd.f32 %v720, %v751
    %753 = vmatmul.f32.gmra.mxu0 %v682
    %v754 = vpop.f32.mrf.mxu0
    %v755 = vadd.f32 %v720, %v754
    %756 = vmatmul.f32.gmra.mxu0 %v683
    %v757 = vpop.f32.mrf.mxu0
    %v758 = vadd.f32 %v720, %v757
    %759 = vmatmul.f32.gmra.mxu0 %v684
    %v760 = vpop.f32.mrf.mxu0
    %v761 = vadd.f32 %v720, %v760
    %762 = vmatmul.f32.gmra.mxu0 %v685
    %v763 = vpop.f32.mrf.mxu0
    %v764 = vadd.f32 %v720, %v763
    %765 = vmatmul.f32.gmra.mxu0 %v686
    %v766 = vpop.f32.mrf.mxu0
    %v767 = vadd.f32 %v720, %v766
    %768 = vmatmul.f32.gmra.mxu0 %v687
    %v769 = vpop.f32.mrf.mxu0
    %v770 = vadd.f32 %v720, %v769
    %771 = vmatmul.f32.gmra.mxu0 %v688
    %v772 = vpop.f32.mrf.mxu0
    %v773 = vadd.f32 %v720, %v772
    %774 = vmatmul.f32.gmra.mxu0 %v689
    %v775 = vpop.f32.mrf.mxu0
    %v776 = vadd.f32 %v720, %v775
    %777 = vmatmul.f32.gmra.mxu0 %v690
    %v778 = vpop.f32.mrf.mxu0
    %v779 = vadd.f32 %v720, %v778
    %780 = vmatmul.f32.gmra.mxu0 %v691
    %v781 = vpop.f32.mrf.mxu0
    %v782 = vadd.f32 %v720, %v781
    %783 = vmatmul.f32.gmra.mxu0 %v692
    %v784 = vpop.f32.mrf.mxu0
    %v785 = vadd.f32 %v720, %v784
    %786 = vmatmul.f32.gmra.mxu0 %v693
    %v787 = vpop.f32.mrf.mxu0
    %v788 = vadd.f32 %v720, %v787
    %789 = vmatmul.f32.gmra.mxu0 %v694
    %v790 = vpop.f32.mrf.mxu0
    %v791 = vadd.f32 %v720, %v790
    %792 = vmatmul.f32.gmra.mxu0 %v695
    %v793 = vpop.f32.mrf.mxu0
    %v794 = vadd.f32 %v720, %v793
    %795 = vmatmul.f32.gmra.mxu0 %v696
    %v796 = vpop.f32.mrf.mxu0
    %v797 = vadd.f32 %v720, %v796
    %798 = vmatmul.f32.gmra.mxu0 %v697
    %v799 = vpop.f32.mrf.mxu0
    %v800 = vadd.f32 %v720, %v799
    %801 = vmatmul.f32.gmra.mxu0 %v698
    %v802 = vpop.f32.mrf.mxu0
    %v803 = vadd.f32 %v720, %v802
    %804 = vmatmul.f32.gmra.mxu0 %v699
    %v805 = vpop.f32.mrf.mxu0
    %v806 = vadd.f32 %v720, %v805
    %807 = vmatmul.f32.gmra.mxu0 %v700
    %v808 = vpop.f32.mrf.mxu0
    %v809 = vadd.f32 %v720, %v808
    %810 = vmatmul.f32.gmra.mxu0 %v701
    %v811 = vpop.f32.mrf.mxu0
    %v812 = vadd.f32 %v720, %v811
    %813 = vdwg.mxu0
    %v814 = vmul.f32 %v740, %v740
    %v815 = vmul.f32 %v743, %v743
    %v816 = vmul.f32 %v746, %v746
    %v817 = vmul.f32 %v749, %v749
    %v818 = vmul.f32 %v752, %v752
    %v819 = vmul.f32 %v755, %v755
    %v820 = vmul.f32 %v758, %v758
    %v821 = vmul.f32 %v761, %v761
    %v822 = vmul.f32 %v764, %v764
    %v823 = vmul.f32 %v767, %v767
    %v824 = vmul.f32 %v770, %v770
    %v825 = vmul.f32 %v773, %v773
    %v826 = vmul.f32 %v776, %v776
    %v827 = vmul.f32 %v779, %v779
    %v828 = vmul.f32 %v782, %v782
    %v829 = vmul.f32 %v785, %v785
    %v830 = vmul.f32 %v788, %v788
    %v831 = vmul.f32 %v791, %v791
    %v832 = vmul.f32 %v794, %v794
    %v833 = vmul.f32 %v797, %v797
    %v834 = vmul.f32 %v800, %v800
    %v835 = vmul.f32 %v803, %v803
    %v836 = vmul.f32 %v806, %v806
    %v837 = vmul.f32 %v809, %v809
    %v838 = vmul.f32 %v812, %v812
    %839 = vadd.xlane.f32.xlu0 %v814
    %v840 = vpop.xlane.xlu0 %839
    %841 = vadd.xlane.f32.xlu0 %v815
    %v842 = vpop.xlane.xlu0 %841
    %843 = vadd.xlane.f32.xlu0 %v816
    %v844 = vpop.xlane.xlu0 %843
    %845 = vadd.xlane.f32.xlu0 %v817
    %v846 = vpop.xlane.xlu0 %845
    %847 = vadd.xlane.f32.xlu0 %v818
    %v848 = vpop.xlane.xlu0 %847
    %849 = vadd.xlane.f32.xlu0 %v819
    %v850 = vpop.xlane.xlu0 %849
    %851 = vadd.xlane.f32.xlu0 %v820
    %v852 = vpop.xlane.xlu0 %851
    %853 = vadd.xlane.f32.xlu0 %v821
    %v854 = vpop.xlane.xlu0 %853
    %855 = vadd.xlane.f32.xlu0 %v822
    %v856 = vpop.xlane.xlu0 %855
    %857 = vadd.xlane.f32.xlu0 %v823
    %v858 = vpop.xlane.xlu0 %857
    %859 = vadd.xlane.f32.xlu0 %v824
    %v860 = vpop.xlane.xlu0 %859
    %861 = vadd.xlane.f32.xlu0 %v825
    %v862 = vpop.xlane.xlu0 %861
    %863 = vadd.xlane.f32.xlu0 %v826
    %v864 = vpop.xlane.xlu0 %863
    %865 = vadd.xlane.f32.xlu0 %v827
    %v866 = vpop.xlane.xlu0 %865
    %867 = vadd.xlane.f32.xlu0 %v828
    %v868 = vpop.xlane.xlu0 %867
    %869 = vadd.xlane.f32.xlu0 %v829
    %v870 = vpop.xlane.xlu0 %869
    %871 = vadd.xlane.f32.xlu0 %v830
    %v872 = vpop.xlane.xlu0 %871
    %873 = vadd.xlane.f32.xlu0 %v831
    %v874 = vpop.xlane.xlu0 %873
    %875 = vadd.xlane.f32.xlu0 %v832
    %v876 = vpop.xlane.xlu0 %875
    %877 = vadd.xlane.f32.xlu0 %v833
    %v878 = vpop.xlane.xlu0 %877
    %879 = vadd.xlane.f32.xlu0 %v834
    %v880 = vpop.xlane.xlu0 %879
    %881 = vadd.xlane.f32.xlu0 %v835
    %v882 = vpop.xlane.xlu0 %881
    %883 = vadd.xlane.f32.xlu0 %v836
    %v884 = vpop.xlane.xlu0 %883
    %885 = vadd.xlane.f32.xlu0 %v837
    %v886 = vpop.xlane.xlu0 %885
    %887 = vadd.xlane.f32.xlu0 %v838
    %v888 = vpop.xlane.xlu0 %887
    %v889 = vrsqrt.pop %v840
    %v890 = vmul.f32 %v889, %v840
    %v891 = vmul.f32 %v890, %v889
    %v892 = vmul.f32 0.5, %v891
    %v893 = vsub.f32 1.5, %v892
    %v894 = vmul.f32 %v889, %v893
    %v895 = vmul.f32 %v840, %v894
    %vm896 = vcmp.eq.f32.partialorder %v840, inf
    %v897 = vsel %vm896, %v840, %v895
    %vm898 = vcmp.eq.f32.partialorder %v840, 0.0
    %v899 = vand.u32 %v840, 2147483648
    %v900 = vsel %vm898, %v899, %v897
    %v901 = vrsqrt.pop %v842
    %v902 = vmul.f32 %v901, %v842
    %v903 = vmul.f32 %v902, %v901
    %v904 = vmul.f32 0.5, %v903
    %v905 = vsub.f32 1.5, %v904
    %v906 = vmul.f32 %v901, %v905
    %v907 = vmul.f32 %v842, %v906
    %vm908 = vcmp.eq.f32.partialorder %v842, inf
    %v909 = vsel %vm908, %v842, %v907
    %vm910 = vcmp.eq.f32.partialorder %v842, 0.0
    %v911 = vand.u32 %v842, 2147483648
    %v912 = vsel %vm910, %v911, %v909
    %v913 = vrsqrt.pop %v844
    %v914 = vmul.f32 %v913, %v844
    %v915 = vmul.f32 %v914, %v913
    %v916 = vmul.f32 0.5, %v915
    %v917 = vsub.f32 1.5, %v916
    %v918 = vmul.f32 %v913, %v917
    %v919 = vmul.f32 %v844, %v918
    %vm920 = vcmp.eq.f32.partialorder %v844, inf
    %v921 = vsel %vm920, %v844, %v919
    %vm922 = vcmp.eq.f32.partialorder %v844, 0.0
    %v923 = vand.u32 %v844, 2147483648
    %v924 = vsel %vm922, %v923, %v921
    %v925 = vrsqrt.pop %v846
    %v926 = vmul.f32 %v925, %v846
    %v927 = vmul.f32 %v926, %v925
    %v928 = vmul.f32 0.5, %v927
    %v929 = vsub.f32 1.5, %v928
    %v930 = vmul.f32 %v925, %v929
    %v931 = vmul.f32 %v846, %v930
    %vm932 = vcmp.eq.f32.partialorder %v846, inf
    %v933 = vsel %vm932, %v846, %v931
    %vm934 = vcmp.eq.f32.partialorder %v846, 0.0
    %v935 = vand.u32 %v846, 2147483648
    %v936 = vsel %vm934, %v935, %v933
    %v937 = vrsqrt.pop %v848
    %v938 = vmul.f32 %v937, %v848
    %v939 = vmul.f32 %v938, %v937
    %v940 = vmul.f32 0.5, %v939
    %v941 = vsub.f32 1.5, %v940
    %v942 = vmul.f32 %v937, %v941
    %v943 = vmul.f32 %v848, %v942
    %vm944 = vcmp.eq.f32.partialorder %v848, inf
    %v945 = vsel %vm944, %v848, %v943
    %vm946 = vcmp.eq.f32.partialorder %v848, 0.0
    %v947 = vand.u32 %v848, 2147483648
    %v948 = vsel %vm946, %v947, %v945
    %v949 = vrsqrt.pop %v850
    %v950 = vmul.f32 %v949, %v850
    %v951 = vmul.f32 %v950, %v949
    %v952 = vmul.f32 0.5, %v951
    %v953 = vsub.f32 1.5, %v952
    %v954 = vmul.f32 %v949, %v953
    %v955 = vmul.f32 %v850, %v954
    %vm956 = vcmp.eq.f32.partialorder %v850, inf
    %v957 = vsel %vm956, %v850, %v955
    %vm958 = vcmp.eq.f32.partialorder %v850, 0.0
    %v959 = vand.u32 %v850, 2147483648
    %v960 = vsel %vm958, %v959, %v957
    %v961 = vrsqrt.pop %v852
    %v962 = vmul.f32 %v961, %v852
    %v963 = vmul.f32 %v962, %v961
    %v964 = vmul.f32 0.5, %v963
    %v965 = vsub.f32 1.5, %v964
    %v966 = vmul.f32 %v961, %v965
    %v967 = vmul.f32 %v852, %v966
    %vm968 = vcmp.eq.f32.partialorder %v852, inf
    %v969 = vsel %vm968, %v852, %v967
    %vm970 = vcmp.eq.f32.partialorder %v852, 0.0
    %v971 = vand.u32 %v852, 2147483648
    %v972 = vsel %vm970, %v971, %v969
    %v973 = vrsqrt.pop %v854
    %v974 = vmul.f32 %v973, %v854
    %v975 = vmul.f32 %v974, %v973
    %v976 = vmul.f32 0.5, %v975
    %v977 = vsub.f32 1.5, %v976
    %v978 = vmul.f32 %v973, %v977
    %v979 = vmul.f32 %v854, %v978
    %vm980 = vcmp.eq.f32.partialorder %v854, inf
    %v981 = vsel %vm980, %v854, %v979
    %vm982 = vcmp.eq.f32.partialorder %v854, 0.0
    %v983 = vand.u32 %v854, 2147483648
    %v984 = vsel %vm982, %v983, %v981
    %v985 = vrsqrt.pop %v856
    %v986 = vmul.f32 %v985, %v856
    %v987 = vmul.f32 %v986, %v985
    %v988 = vmul.f32 0.5, %v987
    %v989 = vsub.f32 1.5, %v988
    %v990 = vmul.f32 %v985, %v989
    %v991 = vmul.f32 %v856, %v990
    %vm992 = vcmp.eq.f32.partialorder %v856, inf
    %v993 = vsel %vm992, %v856, %v991
    %vm994 = vcmp.eq.f32.partialorder %v856, 0.0
    %v995 = vand.u32 %v856, 2147483648
    %v996 = vsel %vm994, %v995, %v993
    %v997 = vrsqrt.pop %v858
    %v998 = vmul.f32 %v997, %v858
    %v999 = vmul.f32 %v998, %v997
    %v1000 = vmul.f32 0.5, %v999
    %v1001 = vsub.f32 1.5, %v1000
    %v1002 = vmul.f32 %v997, %v1001
    %v1003 = vmul.f32 %v858, %v1002
    %vm1004 = vcmp.eq.f32.partialorder %v858, inf
    %v1005 = vsel %vm1004, %v858, %v1003
    %vm1006 = vcmp.eq.f32.partialorder %v858, 0.0
    %v1007 = vand.u32 %v858, 2147483648
    %v1008 = vsel %vm1006, %v1007, %v1005
    %v1009 = vrsqrt.pop %v860
    %v1010 = vmul.f32 %v1009, %v860
    %v1011 = vmul.f32 %v1010, %v1009
    %v1012 = vmul.f32 0.5, %v1011
    %v1013 = vsub.f32 1.5, %v1012
    %v1014 = vmul.f32 %v1009, %v1013
    %v1015 = vmul.f32 %v860, %v1014
    %vm1016 = vcmp.eq.f32.partialorder %v860, inf
    %v1017 = vsel %vm1016, %v860, %v1015
    %vm1018 = vcmp.eq.f32.partialorder %v860, 0.0
    %v1019 = vand.u32 %v860, 2147483648
    %v1020 = vsel %vm1018, %v1019, %v1017
    %v1021 = vrsqrt.pop %v862
    %v1022 = vmul.f32 %v1021, %v862
    %v1023 = vmul.f32 %v1022, %v1021
    %v1024 = vmul.f32 0.5, %v1023
    %v1025 = vsub.f32 1.5, %v1024
    %v1026 = vmul.f32 %v1021, %v1025
    %v1027 = vmul.f32 %v862, %v1026
    %vm1028 = vcmp.eq.f32.partialorder %v862, inf
    %v1029 = vsel %vm1028, %v862, %v1027
    %vm1030 = vcmp.eq.f32.partialorder %v862, 0.0
    %v1031 = vand.u32 %v862, 2147483648
    %v1032 = vsel %vm1030, %v1031, %v1029
    %v1033 = vrsqrt.pop %v864
    %v1034 = vmul.f32 %v1033, %v864
    %v1035 = vmul.f32 %v1034, %v1033
    %v1036 = vmul.f32 0.5, %v1035
    %v1037 = vsub.f32 1.5, %v1036
    %v1038 = vmul.f32 %v1033, %v1037
    %v1039 = vmul.f32 %v864, %v1038
    %vm1040 = vcmp.eq.f32.partialorder %v864, inf
    %v1041 = vsel %vm1040, %v864, %v1039
    %vm1042 = vcmp.eq.f32.partialorder %v864, 0.0
    %v1043 = vand.u32 %v864, 2147483648
    %v1044 = vsel %vm1042, %v1043, %v1041
    %v1045 = vrsqrt.pop %v866
    %v1046 = vmul.f32 %v1045, %v866
    %v1047 = vmul.f32 %v1046, %v1045
    %v1048 = vmul.f32 0.5, %v1047
    %v1049 = vsub.f32 1.5, %v1048
    %v1050 = vmul.f32 %v1045, %v1049
    %v1051 = vmul.f32 %v866, %v1050
    %vm1052 = vcmp.eq.f32.partialorder %v866, inf
    %v1053 = vsel %vm1052, %v866, %v1051
    %vm1054 = vcmp.eq.f32.partialorder %v866, 0.0
    %v1055 = vand.u32 %v866, 2147483648
    %v1056 = vsel %vm1054, %v1055, %v1053
    %v1057 = vrsqrt.pop %v868
    %v1058 = vmul.f32 %v1057, %v868
    %v1059 = vmul.f32 %v1058, %v1057
    %v1060 = vmul.f32 0.5, %v1059
    %v1061 = vsub.f32 1.5, %v1060
    %v1062 = vmul.f32 %v1057, %v1061
    %v1063 = vmul.f32 %v868, %v1062
    %vm1064 = vcmp.eq.f32.partialorder %v868, inf
    %v1065 = vsel %vm1064, %v868, %v1063
    %vm1066 = vcmp.eq.f32.partialorder %v868, 0.0
    %v1067 = vand.u32 %v868, 2147483648
    %v1068 = vsel %vm1066, %v1067, %v1065
    %v1069 = vrsqrt.pop %v870
    %v1070 = vmul.f32 %v1069, %v870
    %v1071 = vmul.f32 %v1070, %v1069
    %v1072 = vmul.f32 0.5, %v1071
    %v1073 = vsub.f32 1.5, %v1072
    %v1074 = vmul.f32 %v1069, %v1073
    %v1075 = vmul.f32 %v870, %v1074
    %vm1076 = vcmp.eq.f32.partialorder %v870, inf
    %v1077 = vsel %vm1076, %v870, %v1075
    %vm1078 = vcmp.eq.f32.partialorder %v870, 0.0
    %v1079 = vand.u32 %v870, 2147483648
    %v1080 = vsel %vm1078, %v1079, %v1077
    %v1081 = vrsqrt.pop %v872
    %v1082 = vmul.f32 %v1081, %v872
    %v1083 = vmul.f32 %v1082, %v1081
    %v1084 = vmul.f32 0.5, %v1083
    %v1085 = vsub.f32 1.5, %v1084
    %v1086 = vmul.f32 %v1081, %v1085
    %v1087 = vmul.f32 %v872, %v1086
    %vm1088 = vcmp.eq.f32.partialorder %v872, inf
    %v1089 = vsel %vm1088, %v872, %v1087
    %vm1090 = vcmp.eq.f32.partialorder %v872, 0.0
    %v1091 = vand.u32 %v872, 2147483648
    %v1092 = vsel %vm1090, %v1091, %v1089
    %v1093 = vrsqrt.pop %v874
    %v1094 = vmul.f32 %v1093, %v874
    %v1095 = vmul.f32 %v1094, %v1093
    %v1096 = vmul.f32 0.5, %v1095
    %v1097 = vsub.f32 1.5, %v1096
    %v1098 = vmul.f32 %v1093, %v1097
    %v1099 = vmul.f32 %v874, %v1098
    %vm1100 = vcmp.eq.f32.partialorder %v874, inf
    %v1101 = vsel %vm1100, %v874, %v1099
    %vm1102 = vcmp.eq.f32.partialorder %v874, 0.0
    %v1103 = vand.u32 %v874, 2147483648
    %v1104 = vsel %vm1102, %v1103, %v1101
    %v1105 = vrsqrt.pop %v876
    %v1106 = vmul.f32 %v1105, %v876
    %v1107 = vmul.f32 %v1106, %v1105
    %v1108 = vmul.f32 0.5, %v1107
    %v1109 = vsub.f32 1.5, %v1108
    %v1110 = vmul.f32 %v1105, %v1109
    %v1111 = vmul.f32 %v876, %v1110
    %vm1112 = vcmp.eq.f32.partialorder %v876, inf
    %v1113 = vsel %vm1112, %v876, %v1111
    %vm1114 = vcmp.eq.f32.partialorder %v876, 0.0
    %v1115 = vand.u32 %v876, 2147483648
    %v1116 = vsel %vm1114, %v1115, %v1113
    %v1117 = vrsqrt.pop %v878
    %v1118 = vmul.f32 %v1117, %v878
    %v1119 = vmul.f32 %v1118, %v1117
    %v1120 = vmul.f32 0.5, %v1119
    %v1121 = vsub.f32 1.5, %v1120
    %v1122 = vmul.f32 %v1117, %v1121
    %v1123 = vmul.f32 %v878, %v1122
    %vm1124 = vcmp.eq.f32.partialorder %v878, inf
    %v1125 = vsel %vm1124, %v878, %v1123
    %vm1126 = vcmp.eq.f32.partialorder %v878, 0.0
    %v1127 = vand.u32 %v878, 2147483648
    %v1128 = vsel %vm1126, %v1127, %v1125
    %v1129 = vrsqrt.pop %v880
    %v1130 = vmul.f32 %v1129, %v880
    %v1131 = vmul.f32 %v1130, %v1129
    %v1132 = vmul.f32 0.5, %v1131
    %v1133 = vsub.f32 1.5, %v1132
    %v1134 = vmul.f32 %v1129, %v1133
    %v1135 = vmul.f32 %v880, %v1134
    %vm1136 = vcmp.eq.f32.partialorder %v880, inf
    %v1137 = vsel %vm1136, %v880, %v1135
    %vm1138 = vcmp.eq.f32.partialorder %v880, 0.0
    %v1139 = vand.u32 %v880, 2147483648
    %v1140 = vsel %vm1138, %v1139, %v1137
    %v1141 = vrsqrt.pop %v882
    %v1142 = vmul.f32 %v1141, %v882
    %v1143 = vmul.f32 %v1142, %v1141
    %v1144 = vmul.f32 0.5, %v1143
    %v1145 = vsub.f32 1.5, %v1144
    %v1146 = vmul.f32 %v1141, %v1145
    %v1147 = vmul.f32 %v882, %v1146
    %vm1148 = vcmp.eq.f32.partialorder %v882, inf
    %v1149 = vsel %vm1148, %v882, %v1147
    %vm1150 = vcmp.eq.f32.partialorder %v882, 0.0
    %v1151 = vand.u32 %v882, 2147483648
    %v1152 = vsel %vm1150, %v1151, %v1149
    %v1153 = vrsqrt.pop %v884
    %v1154 = vmul.f32 %v1153, %v884
    %v1155 = vmul.f32 %v1154, %v1153
    %v1156 = vmul.f32 0.5, %v1155
    %v1157 = vsub.f32 1.5, %v1156
    %v1158 = vmul.f32 %v1153, %v1157
    %v1159 = vmul.f32 %v884, %v1158
    %vm1160 = vcmp.eq.f32.partialorder %v884, inf
    %v1161 = vsel %vm1160, %v884, %v1159
    %vm1162 = vcmp.eq.f32.partialorder %v884, 0.0
    %v1163 = vand.u32 %v884, 2147483648
    %v1164 = vsel %vm1162, %v1163, %v1161
    %v1165 = vrsqrt.pop %v886
    %v1166 = vmul.f32 %v1165, %v886
    %v1167 = vmul.f32 %v1166, %v1165
    %v1168 = vmul.f32 0.5, %v1167
    %v1169 = vsub.f32 1.5, %v1168
    %v1170 = vmul.f32 %v1165, %v1169
    %v1171 = vmul.f32 %v886, %v1170
    %vm1172 = vcmp.eq.f32.partialorder %v886, inf
    %v1173 = vsel %vm1172, %v886, %v1171
    %vm1174 = vcmp.eq.f32.partialorder %v886, 0.0
    %v1175 = vand.u32 %v886, 2147483648
    %v1176 = vsel %vm1174, %v1175, %v1173
    %v1177 = vrsqrt.pop %v888
    %v1178 = vmul.f32 %v1177, %v888
    %v1179 = vmul.f32 %v1178, %v1177
    %v1180 = vmul.f32 0.5, %v1179
    %v1181 = vsub.f32 1.5, %v1180
    %v1182 = vmul.f32 %v1177, %v1181
    %v1183 = vmul.f32 %v888, %v1182
    %vm1184 = vcmp.eq.f32.partialorder %v888, inf
    %v1185 = vsel %vm1184, %v888, %v1183
    %vm1186 = vcmp.eq.f32.partialorder %v888, 0.0
    %v1187 = vand.u32 %v888, 2147483648
    %v1188 = vsel %vm1186, %v1187, %v1185
    %v1189 = vmax.f32 %v900, 1e-12
    %v1190 = vmax.f32 %v912, 1e-12
    %v1191 = vmax.f32 %v924, 1e-12
    %v1192 = vmax.f32 %v936, 1e-12
    %v1193 = vmax.f32 %v948, 1e-12
    %v1194 = vmax.f32 %v960, 1e-12
    %v1195 = vmax.f32 %v972, 1e-12
    %v1196 = vmax.f32 %v984, 1e-12
    %v1197 = vmax.f32 %v996, 1e-12
    %v1198 = vmax.f32 %v1008, 1e-12
    %v1199 = vmax.f32 %v1020, 1e-12
    %v1200 = vmax.f32 %v1032, 1e-12
    %v1201 = vmax.f32 %v1044, 1e-12
    %v1202 = vmax.f32 %v1056, 1e-12
    %v1203 = vmax.f32 %v1068, 1e-12
    %v1204 = vmax.f32 %v1080, 1e-12
    %v1205 = vmax.f32 %v1092, 1e-12
    %v1206 = vmax.f32 %v1104, 1e-12
    %v1207 = vmax.f32 %v1116, 1e-12
    %v1208 = vmax.f32 %v1128, 1e-12
    %v1209 = vmax.f32 %v1140, 1e-12
    %v1210 = vmax.f32 %v1152, 1e-12
    %v1211 = vmax.f32 %v1164, 1e-12
    %v1212 = vmax.f32 %v1176, 1e-12
    %v1213 = vmax.f32 %v1188, 1e-12
    %v1214 = vrcp.pop %v1189
    %v1215 = vmul.f32 %v1189, %v1214
    %v1216 = vsub.f32 1.0, %v1215
    %v1217 = vmul.f32 %v1214, %v1216
    %v1218 = vadd.f32 %v1214, %v1217
    %vm1219 = vweird.f32 %v1189
    %vm1220 = vweird.f32 %v1214
    %vm1221 = vmor %vm1219, %vm1220
    %v1222 = vsel %vm1221, %v1214, %v1218
    %v1223 = vand.u32 2147483647, %v1189
    %vm1224 = vcmp.eq.f32.partialorder %v1223, 8.507059e+37
    %v1225 = vand.u32 %v1189, 2147483648
    %v1226 = vor.u32 1.1754944e-38, %v1225
    %v1227 = vsel %vm1224, %v1226, %v1222
    %v1228 = vmul.f32 %v740, %v1227
    %v1229 = vrcp.pop %v1190
    %v1230 = vmul.f32 %v1190, %v1229
    %v1231 = vsub.f32 1.0, %v1230
    %v1232 = vmul.f32 %v1229, %v1231
    %v1233 = vadd.f32 %v1229, %v1232
    %vm1234 = vweird.f32 %v1190
    %vm1235 = vweird.f32 %v1229
    %vm1236 = vmor %vm1234, %vm1235
    %v1237 = vsel %vm1236, %v1229, %v1233
    %v1238 = vand.u32 2147483647, %v1190
    %vm1239 = vcmp.eq.f32.partialorder %v1238, 8.507059e+37
    %v1240 = vand.u32 %v1190, 2147483648
    %v1241 = vor.u32 1.1754944e-38, %v1240
    %v1242 = vsel %vm1239, %v1241, %v1237
    %v1243 = vmul.f32 %v743, %v1242
    %v1244 = vrcp.pop %v1191
    %v1245 = vmul.f32 %v1191, %v1244
    %v1246 = vsub.f32 1.0, %v1245
    %v1247 = vmul.f32 %v1244, %v1246
    %v1248 = vadd.f32 %v1244, %v1247
    %vm1249 = vweird.f32 %v1191
    %vm1250 = vweird.f32 %v1244
    %vm1251 = vmor %vm1249, %vm1250
    %v1252 = vsel %vm1251, %v1244, %v1248
    %v1253 = vand.u32 2147483647, %v1191
    %vm1254 = vcmp.eq.f32.partialorder %v1253, 8.507059e+37
    %v1255 = vand.u32 %v1191, 2147483648
    %v1256 = vor.u32 1.1754944e-38, %v1255
    %v1257 = vsel %vm1254, %v1256, %v1252
    %v1258 = vmul.f32 %v746, %v1257
    %v1259 = vrcp.pop %v1192
    %v1260 = vmul.f32 %v1192, %v1259
    %v1261 = vsub.f32 1.0, %v1260
    %v1262 = vmul.f32 %v1259, %v1261
    %v1263 = vadd.f32 %v1259, %v1262
    %vm1264 = vweird.f32 %v1192
    %vm1265 = vweird.f32 %v1259
    %vm1266 = vmor %vm1264, %vm1265
    %v1267 = vsel %vm1266, %v1259, %v1263
    %v1268 = vand.u32 2147483647, %v1192
    %vm1269 = vcmp.eq.f32.partialorder %v1268, 8.507059e+37
    %v1270 = vand.u32 %v1192, 2147483648
    %v1271 = vor.u32 1.1754944e-38, %v1270
    %v1272 = vsel %vm1269, %v1271, %v1267
    %v1273 = vmul.f32 %v749, %v1272
    %v1274 = vrcp.pop %v1193
    %v1275 = vmul.f32 %v1193, %v1274
    %v1276 = vsub.f32 1.0, %v1275
    %v1277 = vmul.f32 %v1274, %v1276
    %v1278 = vadd.f32 %v1274, %v1277
    %vm1279 = vweird.f32 %v1193
    %vm1280 = vweird.f32 %v1274
    %vm1281 = vmor %vm1279, %vm1280
    %v1282 = vsel %vm1281, %v1274, %v1278
    %v1283 = vand.u32 2147483647, %v1193
    %vm1284 = vcmp.eq.f32.partialorder %v1283, 8.507059e+37
    %v1285 = vand.u32 %v1193, 2147483648
    %v1286 = vor.u32 1.1754944e-38, %v1285
    %v1287 = vsel %vm1284, %v1286, %v1282
    %v1288 = vmul.f32 %v752, %v1287
    %v1289 = vrcp.pop %v1194
    %v1290 = vmul.f32 %v1194, %v1289
    %v1291 = vsub.f32 1.0, %v1290
    %v1292 = vmul.f32 %v1289, %v1291
    %v1293 = vadd.f32 %v1289, %v1292
    %vm1294 = vweird.f32 %v1194
    %vm1295 = vweird.f32 %v1289
    %vm1296 = vmor %vm1294, %vm1295
    %v1297 = vsel %vm1296, %v1289, %v1293
    %v1298 = vand.u32 2147483647, %v1194
    %vm1299 = vcmp.eq.f32.partialorder %v1298, 8.507059e+37
    %v1300 = vand.u32 %v1194, 2147483648
    %v1301 = vor.u32 1.1754944e-38, %v1300
    %v1302 = vsel %vm1299, %v1301, %v1297
    %v1303 = vmul.f32 %v755, %v1302
    %v1304 = vrcp.pop %v1195
    %v1305 = vmul.f32 %v1195, %v1304
    %v1306 = vsub.f32 1.0, %v1305
    %v1307 = vmul.f32 %v1304, %v1306
    %v1308 = vadd.f32 %v1304, %v1307
    %vm1309 = vweird.f32 %v1195
    %vm1310 = vweird.f32 %v1304
    %vm1311 = vmor %vm1309, %vm1310
    %v1312 = vsel %vm1311, %v1304, %v1308
    %v1313 = vand.u32 2147483647, %v1195
    %vm1314 = vcmp.eq.f32.partialorder %v1313, 8.507059e+37
    %v1315 = vand.u32 %v1195, 2147483648
    %v1316 = vor.u32 1.1754944e-38, %v1315
    %v1317 = vsel %vm1314, %v1316, %v1312
    %v1318 = vmul.f32 %v758, %v1317
    %v1319 = vrcp.pop %v1196
    %v1320 = vmul.f32 %v1196, %v1319
    %v1321 = vsub.f32 1.0, %v1320
    %v1322 = vmul.f32 %v1319, %v1321
    %v1323 = vadd.f32 %v1319, %v1322
    %vm1324 = vweird.f32 %v1196
    %vm1325 = vweird.f32 %v1319
    %vm1326 = vmor %vm1324, %vm1325
    %v1327 = vsel %vm1326, %v1319, %v1323
    %v1328 = vand.u32 2147483647, %v1196
    %vm1329 = vcmp.eq.f32.partialorder %v1328, 8.507059e+37
    %v1330 = vand.u32 %v1196, 2147483648
    %v1331 = vor.u32 1.1754944e-38, %v1330
    %v1332 = vsel %vm1329, %v1331, %v1327
    %v1333 = vmul.f32 %v761, %v1332
    %v1334 = vrcp.pop %v1197
    %v1335 = vmul.f32 %v1197, %v1334
    %v1336 = vsub.f32 1.0, %v1335
    %v1337 = vmul.f32 %v1334, %v1336
    %v1338 = vadd.f32 %v1334, %v1337
    %vm1339 = vweird.f32 %v1197
    %vm1340 = vweird.f32 %v1334
    %vm1341 = vmor %vm1339, %vm1340
    %v1342 = vsel %vm1341, %v1334, %v1338
    %v1343 = vand.u32 2147483647, %v1197
    %vm1344 = vcmp.eq.f32.partialorder %v1343, 8.507059e+37
    %v1345 = vand.u32 %v1197, 2147483648
    %v1346 = vor.u32 1.1754944e-38, %v1345
    %v1347 = vsel %vm1344, %v1346, %v1342
    %v1348 = vmul.f32 %v764, %v1347
    %v1349 = vrcp.pop %v1198
    %v1350 = vmul.f32 %v1198, %v1349
    %v1351 = vsub.f32 1.0, %v1350
    %v1352 = vmul.f32 %v1349, %v1351
    %v1353 = vadd.f32 %v1349, %v1352
    %vm1354 = vweird.f32 %v1198
    %vm1355 = vweird.f32 %v1349
    %vm1356 = vmor %vm1354, %vm1355
    %v1357 = vsel %vm1356, %v1349, %v1353
    %v1358 = vand.u32 2147483647, %v1198
    %vm1359 = vcmp.eq.f32.partialorder %v1358, 8.507059e+37
    %v1360 = vand.u32 %v1198, 2147483648
    %v1361 = vor.u32 1.1754944e-38, %v1360
    %v1362 = vsel %vm1359, %v1361, %v1357
    %v1363 = vmul.f32 %v767, %v1362
    %v1364 = vrcp.pop %v1199
    %v1365 = vmul.f32 %v1199, %v1364
    %v1366 = vsub.f32 1.0, %v1365
    %v1367 = vmul.f32 %v1364, %v1366
    %v1368 = vadd.f32 %v1364, %v1367
    %vm1369 = vweird.f32 %v1199
    %vm1370 = vweird.f32 %v1364
    %vm1371 = vmor %vm1369, %vm1370
    %v1372 = vsel %vm1371, %v1364, %v1368
    %v1373 = vand.u32 2147483647, %v1199
    %vm1374 = vcmp.eq.f32.partialorder %v1373, 8.507059e+37
    %v1375 = vand.u32 %v1199, 2147483648
    %v1376 = vor.u32 1.1754944e-38, %v1375
    %v1377 = vsel %vm1374, %v1376, %v1372
    %v1378 = vmul.f32 %v770, %v1377
    %v1379 = vrcp.pop %v1200
    %v1380 = vmul.f32 %v1200, %v1379
    %v1381 = vsub.f32 1.0, %v1380
    %v1382 = vmul.f32 %v1379, %v1381
    %v1383 = vadd.f32 %v1379, %v1382
    %vm1384 = vweird.f32 %v1200
    %vm1385 = vweird.f32 %v1379
    %vm1386 = vmor %vm1384, %vm1385
    %v1387 = vsel %vm1386, %v1379, %v1383
    %v1388 = vand.u32 2147483647, %v1200
    %vm1389 = vcmp.eq.f32.partialorder %v1388, 8.507059e+37
    %v1390 = vand.u32 %v1200, 2147483648
    %v1391 = vor.u32 1.1754944e-38, %v1390
    %v1392 = vsel %vm1389, %v1391, %v1387
    %v1393 = vmul.f32 %v773, %v1392
    %v1394 = vrcp.pop %v1201
    %v1395 = vmul.f32 %v1201, %v1394
    %v1396 = vsub.f32 1.0, %v1395
    %v1397 = vmul.f32 %v1394, %v1396
    %v1398 = vadd.f32 %v1394, %v1397
    %vm1399 = vweird.f32 %v1201
    %vm1400 = vweird.f32 %v1394
    %vm1401 = vmor %vm1399, %vm1400
    %v1402 = vsel %vm1401, %v1394, %v1398
    %v1403 = vand.u32 2147483647, %v1201
    %vm1404 = vcmp.eq.f32.partialorder %v1403, 8.507059e+37
    %v1405 = vand.u32 %v1201, 2147483648
    %v1406 = vor.u32 1.1754944e-38, %v1405
    %v1407 = vsel %vm1404, %v1406, %v1402
    %v1408 = vmul.f32 %v776, %v1407
    %v1409 = vrcp.pop %v1202
    %v1410 = vmul.f32 %v1202, %v1409
    %v1411 = vsub.f32 1.0, %v1410
    %v1412 = vmul.f32 %v1409, %v1411
    %v1413 = vadd.f32 %v1409, %v1412
    %vm1414 = vweird.f32 %v1202
    %vm1415 = vweird.f32 %v1409
    %vm1416 = vmor %vm1414, %vm1415
    %v1417 = vsel %vm1416, %v1409, %v1413
    %v1418 = vand.u32 2147483647, %v1202
    %vm1419 = vcmp.eq.f32.partialorder %v1418, 8.507059e+37
    %v1420 = vand.u32 %v1202, 2147483648
    %v1421 = vor.u32 1.1754944e-38, %v1420
    %v1422 = vsel %vm1419, %v1421, %v1417
    %v1423 = vmul.f32 %v779, %v1422
    %v1424 = vrcp.pop %v1203
    %v1425 = vmul.f32 %v1203, %v1424
    %v1426 = vsub.f32 1.0, %v1425
    %v1427 = vmul.f32 %v1424, %v1426
    %v1428 = vadd.f32 %v1424, %v1427
    %vm1429 = vweird.f32 %v1203
    %vm1430 = vweird.f32 %v1424
    %vm1431 = vmor %vm1429, %vm1430
    %v1432 = vsel %vm1431, %v1424, %v1428
    %v1433 = vand.u32 2147483647, %v1203
    %vm1434 = vcmp.eq.f32.partialorder %v1433, 8.507059e+37
    %v1435 = vand.u32 %v1203, 2147483648
    %v1436 = vor.u32 1.1754944e-38, %v1435
    %v1437 = vsel %vm1434, %v1436, %v1432
    %v1438 = vmul.f32 %v782, %v1437
    %v1439 = vrcp.pop %v1204
    %v1440 = vmul.f32 %v1204, %v1439
    %v1441 = vsub.f32 1.0, %v1440
    %v1442 = vmul.f32 %v1439, %v1441
    %v1443 = vadd.f32 %v1439, %v1442
    %vm1444 = vweird.f32 %v1204
    %vm1445 = vweird.f32 %v1439
    %vm1446 = vmor %vm1444, %vm1445
    %v1447 = vsel %vm1446, %v1439, %v1443
    %v1448 = vand.u32 2147483647, %v1204
    %vm1449 = vcmp.eq.f32.partialorder %v1448, 8.507059e+37
    %v1450 = vand.u32 %v1204, 2147483648
    %v1451 = vor.u32 1.1754944e-38, %v1450
    %v1452 = vsel %vm1449, %v1451, %v1447
    %v1453 = vmul.f32 %v785, %v1452
    %v1454 = vrcp.pop %v1205
    %v1455 = vmul.f32 %v1205, %v1454
    %v1456 = vsub.f32 1.0, %v1455
    %v1457 = vmul.f32 %v1454, %v1456
    %v1458 = vadd.f32 %v1454, %v1457
    %vm1459 = vweird.f32 %v1205
    %vm1460 = vweird.f32 %v1454
    %vm1461 = vmor %vm1459, %vm1460
    %v1462 = vsel %vm1461, %v1454, %v1458
    %v1463 = vand.u32 2147483647, %v1205
    %vm1464 = vcmp.eq.f32.partialorder %v1463, 8.507059e+37
    %v1465 = vand.u32 %v1205, 2147483648
    %v1466 = vor.u32 1.1754944e-38, %v1465
    %v1467 = vsel %vm1464, %v1466, %v1462
    %v1468 = vmul.f32 %v788, %v1467
    %v1469 = vrcp.pop %v1206
    %v1470 = vmul.f32 %v1206, %v1469
    %v1471 = vsub.f32 1.0, %v1470
    %v1472 = vmul.f32 %v1469, %v1471
    %v1473 = vadd.f32 %v1469, %v1472
    %vm1474 = vweird.f32 %v1206
    %vm1475 = vweird.f32 %v1469
    %vm1476 = vmor %vm1474, %vm1475
    %v1477 = vsel %vm1476, %v1469, %v1473
    %v1478 = vand.u32 2147483647, %v1206
    %vm1479 = vcmp.eq.f32.partialorder %v1478, 8.507059e+37
    %v1480 = vand.u32 %v1206, 2147483648
    %v1481 = vor.u32 1.1754944e-38, %v1480
    %v1482 = vsel %vm1479, %v1481, %v1477
    %v1483 = vmul.f32 %v791, %v1482
    %v1484 = vrcp.pop %v1207
    %v1485 = vmul.f32 %v1207, %v1484
    %v1486 = vsub.f32 1.0, %v1485
    %v1487 = vmul.f32 %v1484, %v1486
    %v1488 = vadd.f32 %v1484, %v1487
    %vm1489 = vweird.f32 %v1207
    %vm1490 = vweird.f32 %v1484
    %vm1491 = vmor %vm1489, %vm1490
    %v1492 = vsel %vm1491, %v1484, %v1488
    %v1493 = vand.u32 2147483647, %v1207
    %vm1494 = vcmp.eq.f32.partialorder %v1493, 8.507059e+37
    %v1495 = vand.u32 %v1207, 2147483648
    %v1496 = vor.u32 1.1754944e-38, %v1495
    %v1497 = vsel %vm1494, %v1496, %v1492
    %v1498 = vmul.f32 %v794, %v1497
    %v1499 = vrcp.pop %v1208
    %v1500 = vmul.f32 %v1208, %v1499
    %v1501 = vsub.f32 1.0, %v1500
    %v1502 = vmul.f32 %v1499, %v1501
    %v1503 = vadd.f32 %v1499, %v1502
    %vm1504 = vweird.f32 %v1208
    %vm1505 = vweird.f32 %v1499
    %vm1506 = vmor %vm1504, %vm1505
    %v1507 = vsel %vm1506, %v1499, %v1503
    %v1508 = vand.u32 2147483647, %v1208
    %vm1509 = vcmp.eq.f32.partialorder %v1508, 8.507059e+37
    %v1510 = vand.u32 %v1208, 2147483648
    %v1511 = vor.u32 1.1754944e-38, %v1510
    %v1512 = vsel %vm1509, %v1511, %v1507
    %v1513 = vmul.f32 %v797, %v1512
    %v1514 = vrcp.pop %v1209
    %v1515 = vmul.f32 %v1209, %v1514
    %v1516 = vsub.f32 1.0, %v1515
    %v1517 = vmul.f32 %v1514, %v1516
    %v1518 = vadd.f32 %v1514, %v1517
    %vm1519 = vweird.f32 %v1209
    %vm1520 = vweird.f32 %v1514
    %vm1521 = vmor %vm1519, %vm1520
    %v1522 = vsel %vm1521, %v1514, %v1518
    %v1523 = vand.u32 2147483647, %v1209
    %vm1524 = vcmp.eq.f32.partialorder %v1523, 8.507059e+37
    %v1525 = vand.u32 %v1209, 2147483648
    %v1526 = vor.u32 1.1754944e-38, %v1525
    %v1527 = vsel %vm1524, %v1526, %v1522
    %v1528 = vmul.f32 %v800, %v1527
    %v1529 = vrcp.pop %v1210
    %v1530 = vmul.f32 %v1210, %v1529
    %v1531 = vsub.f32 1.0, %v1530
    %v1532 = vmul.f32 %v1529, %v1531
    %v1533 = vadd.f32 %v1529, %v1532
    %vm1534 = vweird.f32 %v1210
    %vm1535 = vweird.f32 %v1529
    %vm1536 = vmor %vm1534, %vm1535
    %v1537 = vsel %vm1536, %v1529, %v1533
    %v1538 = vand.u32 2147483647, %v1210
    %vm1539 = vcmp.eq.f32.partialorder %v1538, 8.507059e+37
    %v1540 = vand.u32 %v1210, 2147483648
    %v1541 = vor.u32 1.1754944e-38, %v1540
    %v1542 = vsel %vm1539, %v1541, %v1537
    %v1543 = vmul.f32 %v803, %v1542
    %v1544 = vrcp.pop %v1211
    %v1545 = vmul.f32 %v1211, %v1544
    %v1546 = vsub.f32 1.0, %v1545
    %v1547 = vmul.f32 %v1544, %v1546
    %v1548 = vadd.f32 %v1544, %v1547
    %vm1549 = vweird.f32 %v1211
    %vm1550 = vweird.f32 %v1544
    %vm1551 = vmor %vm1549, %vm1550
    %v1552 = vsel %vm1551, %v1544, %v1548
    %v1553 = vand.u32 2147483647, %v1211
    %vm1554 = vcmp.eq.f32.partialorder %v1553, 8.507059e+37
    %v1555 = vand.u32 %v1211, 2147483648
    %v1556 = vor.u32 1.1754944e-38, %v1555
    %v1557 = vsel %vm1554, %v1556, %v1552
    %v1558 = vmul.f32 %v806, %v1557
    %v1559 = vrcp.pop %v1212
    %v1560 = vmul.f32 %v1212, %v1559
    %v1561 = vsub.f32 1.0, %v1560
    %v1562 = vmul.f32 %v1559, %v1561
    %v1563 = vadd.f32 %v1559, %v1562
    %vm1564 = vweird.f32 %v1212
    %vm1565 = vweird.f32 %v1559
    %vm1566 = vmor %vm1564, %vm1565
    %v1567 = vsel %vm1566, %v1559, %v1563
    %v1568 = vand.u32 2147483647, %v1212
    %vm1569 = vcmp.eq.f32.partialorder %v1568, 8.507059e+37
    %v1570 = vand.u32 %v1212, 2147483648
    %v1571 = vor.u32 1.1754944e-38, %v1570
    %v1572 = vsel %vm1569, %v1571, %v1567
    %v1573 = vmul.f32 %v809, %v1572
    %v1574 = vrcp.pop %v1213
    %v1575 = vmul.f32 %v1213, %v1574
    %v1576 = vsub.f32 1.0, %v1575
    %v1577 = vmul.f32 %v1574, %v1576
    %v1578 = vadd.f32 %v1574, %v1577
    %vm1579 = vweird.f32 %v1213
    %vm1580 = vweird.f32 %v1574
    %vm1581 = vmor %vm1579, %vm1580
    %v1582 = vsel %vm1581, %v1574, %v1578
    %v1583 = vand.u32 2147483647, %v1213
    %vm1584 = vcmp.eq.f32.partialorder %v1583, 8.507059e+37
    %v1585 = vand.u32 %v1213, 2147483648
    %v1586 = vor.u32 1.1754944e-38, %v1585
    %v1587 = vsel %vm1584, %v1586, %v1582
    %v1588 = vmul.f32 %v812, %v1587
    %1589 = vst [vmem:[#allocation14] sm:$0xff] %v1228
    %1590 = vst [vmem:[#allocation14 + $0x8] sm:$0xff] %v1243
    %1591 = vst [vmem:[#allocation14 + $0x10] sm:$0xff] %v1258
    %1592 = vst [vmem:[#allocation14 + $0x18] sm:$0xff] %v1273
    %1593 = vst [vmem:[#allocation14 + $0x20] sm:$0xff] %v1288
    %1594 = vst [vmem:[#allocation14 + $0x28] sm:$0xff] %v1303
    %1595 = vst [vmem:[#allocation14 + $0x30] sm:$0xff] %v1318
    %1596 = vst [vmem:[#allocation14 + $0x38] sm:$0xff] %v1333
    %1597 = vst [vmem:[#allocation14 + $0x40] sm:$0xff] %v1348
    %1598 = vst [vmem:[#allocation14 + $0x48] sm:$0xff] %v1363
    %1599 = vst [vmem:[#allocation14 + $0x50] sm:$0xff] %v1378
    %1600 = vst [vmem:[#allocation14 + $0x58] sm:$0xff] %v1393
    %1601 = vst [vmem:[#allocation14 + $0x60] sm:$0xff] %v1408
    %1602 = vst [vmem:[#allocation14 + $0x68] sm:$0xff] %v1423
    %1603 = vst [vmem:[#allocation14 + $0x70] sm:$0xff] %v1438
    %1604 = vst [vmem:[#allocation14 + $0x78] sm:$0xff] %v1453
    %1605 = vst [vmem:[#allocation14 + $0x80] sm:$0xff] %v1468
    %1606 = vst [vmem:[#allocation14 + $0x88] sm:$0xff] %v1483
    %1607 = vst [vmem:[#allocation14 + $0x90] sm:$0xff] %v1498
    %1608 = vst [vmem:[#allocation14 + $0x98] sm:$0xff] %v1513
    %1609 = vst [vmem:[#allocation14 + $0xa0] sm:$0xff] %v1528
    %1610 = vst [vmem:[#allocation14 + $0xa8] sm:$0xff] %v1543
    %1611 = vst [vmem:[#allocation14 + $0xb0] sm:$0xff] %v1558
    %1612 = vst [vmem:[#allocation14 + $0xb8] sm:$0xff] %v1573
    %1613 = vst [vmem:[#allocation14 + $0xc0] sm:$0xff] %v1588
    // Predicated region
    $region74: #{tpu_custom_call.1} parent=1 // pred_check
      _
    $region75: #{tpu_custom_call.1} parent=1 // pred_check_branch
      %1615 = sbr.rel (0) target = $region77
    $region76: #{tpu_custom_call.1} parent=1 // pred_region
      %1617 = vsyncadd [#allocation4], 0
      %s1618 = sshll.u32 [#allocation14], 4
      %s1619 = int_to_ptr.vmem [resolvable:$true] %s1618
      %s1620 = sshll.u32 %s11, 4
      %s1621 = int_to_ptr.hbm [resolvable:$true] %s1620
      %1626 = dma.vmem_to_hbm [thread:$0]  %s1619, 3200, %s1621, [#allocation4], 128, 128, 8
    $region77: #{tpu_custom_call.1} parent=1 // pred_fallthru
      _
    // Predicated region
    $region78: #{tpu_custom_call.1} parent=1 // pred_check
      _
    $region79: #{tpu_custom_call.1} parent=1 // pred_check_branch
      %1628 = sbr.rel (0) target = $region81
    $region80: #{tpu_custom_call.1} parent=1 // pred_region
      %1630 = dma.done [#allocation4], 3200
    $region81: #{tpu_custom_call.1} parent=1 // pred_fallthru
      _
    %1631 = vsyncpa [#allocation3], 1
    %1632 = vsyncpa [#allocation6], 1
    %1633 = vsyncpa [#allocation9], 1
    %1634 = vsyncpa [#allocation12], 1
    %1635 = vsyncpa [#allocation4], 1

</llo_original>
